<compile_context>
chip_gen: v7x
topology: tpu7x:2x2x1
jax: 0.10.0
libtpu: 0.0.40
codegen_flags: <defaults>
</compile_context>

<pallas_src>
import jax
import jax.numpy as jnp
from jax.experimental import pallas as pl
from jax.experimental.pallas import tpu as pltpu

# ---- module hyper-parameters (small, consistent with AGIGradient.__init__) ----
IN_DIM = 16
OUT_DIM = 8
FEATURE_DIM = 32           # nerves hidden / output dim
MEMORY_DIM = 32            # LSTM hidden dim
CROWN_HIDDEN = MEMORY_DIM // 2
BATCH = 1024               # batched forwards per pallas_call
BLOCK_B = 512              # batch tile (one grid step) -> grid (2,) for the demo

FUSED1 = FEATURE_DIM + CROWN_HIDDEN   # 48: rows of the fused sense-consumer matmul
GATES = 3 * MEMORY_DIM                # 96: fused i|g|o gate rows

# ---- parameter-slab layout (single VMEM input, transposed weights) ----------
# 128-lane-wide rows; every region starts at a multiple of 8 sublanes so all
# in-kernel static slices are tile-aligned. Weights are stored TRANSPOSED
# (feature-out in sublanes, feature-in in lanes); biases are stored as lane-0
# columns so they broadcast across the batch-lane axis.
SLAB_LANES = 128
R_WA = 0                                # [W1n^T ; W1c_sense^T]  (48, 16)   rows   0:48
R_WG = 48                               # (w2n @ [wi|wg|wo])^T   (96, 32)   rows  48:144
R_WCH = 144                             # W1c_hidden^T           (16, 32)   rows 144:160
R_W2C = 160                             # W2c^T                  ( 8, 16)   rows 160:168
R_BA = 168                              # [b1n ; b1c] column     (48, 1)    rows 168:216
R_BG = 216                              # folded gate bias col   (96, 1)    rows 216:312
R_B2C = 312                             # b2c column             ( 8, 1)    rows 312:320
PARAM_ROWS = 320                        # multiple of 8


def agi_kernel(x_ref, p_ref, out_ref):
    # x is (IN_DIM, blk): batch lives in the lane dimension (lane-dense everywhere).
    x = x_ref[...]

    # ---- fused sense-consumer matmul: nerves layer-1 + crown layer-1 sense partial
    wa = p_ref[R_WA:R_WA + FUSED1, 0:IN_DIM]                       # (48, 16)
    ba = p_ref[R_BA:R_BA + FUSED1, 0:1]                            # (48, 1)
    a = jnp.dot(wa, x, preferred_element_type=jnp.float32) + ba    # (48, blk)
    h = jnp.maximum(a[0:FEATURE_DIM, :], 0.0)                      # nerves hidden (32, blk)
    crown_sense = a[FEATURE_DIM:FUSED1, :]                         # crown l1 partial (+b1c) (16, blk)

    # ---- hippocampus: nerves layer-2 folded into the fused i|g|o gate matmul
    wg = p_ref[R_WG:R_WG + GATES, 0:FEATURE_DIM]                   # (96, 32)
    bg = p_ref[R_BG:R_BG + GATES, 0:1]                             # (96, 1)
    gates = jnp.dot(wg, h, preferred_element_type=jnp.float32) + bg  # (96, blk)
    # sigmoid(x) == 0.5 * (1 + tanh(0.5 * x)) : one native EUP op per gate
    i_g = 0.5 * (1.0 + jnp.tanh(0.5 * gates[0:MEMORY_DIM, :]))
    g_g = jnp.tanh(gates[MEMORY_DIM:2 * MEMORY_DIM, :])
    o_g = 0.5 * (1.0 + jnp.tanh(0.5 * gates[2 * MEMORY_DIM:GATES, :]))
    recollection = o_g * jnp.tanh(i_g * g_g)                       # (32, blk)

    # ---- crown: layer-1 recollection partial + ReLU, then layer-2
    wch = p_ref[R_WCH:R_WCH + CROWN_HIDDEN, 0:MEMORY_DIM]          # (16, 32)
    q = jnp.maximum(
        crown_sense
        + jnp.dot(wch, recollection, preferred_element_type=jnp.float32), 0.0)  # (16, blk)

    w2c = p_ref[R_W2C:R_W2C + OUT_DIM, 0:CROWN_HIDDEN]             # (8, 16)
    b2c = p_ref[R_B2C:R_B2C + OUT_DIM, 0:1]                        # (8, 1)
    out_ref[...] = jnp.dot(w2c, q, preferred_element_type=jnp.float32) + b2c   # (8, blk)


def init_params(key):
    """Deterministic synthetic parameters matching the module's layer shapes."""
    ks = jax.random.split(key, 16)
    s = 0.1

    def w(k, shape):
        return (s * jax.random.normal(k, shape)).astype(jnp.float32)

    return {
        # nerves = MLP(in_dim + out_dim, feature_dim, feature_dim, 1)
        "w1n": w(ks[0], (IN_DIM + OUT_DIM, FEATURE_DIM)),
        "b1n": w(ks[1], (FEATURE_DIM,)),
        "w2n": w(ks[2], (FEATURE_DIM, FEATURE_DIM)),
        "b2n": w(ks[3], (FEATURE_DIM,)),
        # hippocampus = LSTM(feature_dim, memory_dim, 1): per-gate W_ih^T, bias = b_ih + b_hh
        "wi": w(ks[4], (FEATURE_DIM, MEMORY_DIM)),
        "wg": w(ks[5], (FEATURE_DIM, MEMORY_DIM)),
        "wo": w(ks[6], (FEATURE_DIM, MEMORY_DIM)),
        "bi": w(ks[7], (MEMORY_DIM,)),
        "bg": w(ks[8], (MEMORY_DIM,)),
        "bo": w(ks[9], (MEMORY_DIM,)),
        # crown = MLP(in_dim + memory_dim, out_dim, memory_dim // 2, 1)
        "w1c": w(ks[10], (IN_DIM + MEMORY_DIM, CROWN_HIDDEN)),
        "b1c": w(ks[11], (CROWN_HIDDEN,)),
        "w2c": w(ks[12], (CROWN_HIDDEN, OUT_DIM)),
        "b2c": w(ks[13], (OUT_DIM,)),
    }


def pack_params(p):
    """Pack all weights/biases into one (PARAM_ROWS, 128) f32 slab (single DMA).

    * Transposed weight layout for the batch-in-lanes kernel (W^T as MXU LHS).
    * Null-label rows of w1n are dropped (zero label -> zero contribution);
      valid ONLY for the null-label / null-memory inference path.
    * Nerves layer-2 is folded into the gate matmul: Wg' = w2n @ [wi|wg|wo],
      bg' = b2n @ [wi|wg|wo] + [bi;bg;bo].
    """
    slab = jnp.zeros((PARAM_ROWS, SLAB_LANES), jnp.float32)

    # fused sense-consumer matmul: nerves l1 (label rows dropped) + crown l1 sense part
    wa = jnp.concatenate([p["w1n"][:IN_DIM].T, p["w1c"][:IN_DIM].T], axis=0)   # (48, 16)
    ba = jnp.concatenate([p["b1n"], p["b1c"]], axis=0)                          # (48,)

    # folded gates
    wg_cat = jnp.concatenate([p["wi"], p["wg"], p["wo"]], axis=1)               # (32, 96)
    bg_cat = jnp.concatenate([p["bi"], p["bg"], p["bo"]], axis=0)               # (96,)
    wg_fold = p["w2n"] @ wg_cat                                                 # (32, 96)
    bg_fold = p["b2n"] @ wg_cat + bg_cat                                        # (96,)

    slab = slab.at[R_WA:R_WA + FUSED1, :IN_DIM].set(wa)
    slab = slab.at[R_WG:R_WG + GATES, :FEATURE_DIM].set(wg_fold.T)
    slab = slab.at[R_WCH:R_WCH + CROWN_HIDDEN, :MEMORY_DIM].set(p["w1c"][IN_DIM:].T)
    slab = slab.at[R_W2C:R_W2C + OUT_DIM, :CROWN_HIDDEN].set(p["w2c"].T)
    slab = slab.at[R_BA:R_BA + FUSED1, 0].set(ba)
    slab = slab.at[R_BG:R_BG + GATES, 0].set(bg_fold)
    slab = slab.at[R_B2C:R_B2C + OUT_DIM, 0].set(p["b2c"])
    return slab


def agi_gradient_forward(sense, param_slab, *, block_b=BLOCK_B):
    """Equivalent of AGIGradient.forward(sense) with the default empty label.

    Batched over a 1-D "parallel" grid of `block_b`-column tiles (batch in lanes);
    B is padded up to a multiple of block_b instead of collapsing the grid.
    """
    B = sense.shape[0]
    # Don't tile wider than needed for small batches, but keep lane-dense (>=128).
    block_b = max(128, min(block_b, 128 * ((B + 127) // 128)))
    padded_b = block_b * ((B + block_b - 1) // block_b)
    grid = (padded_b // block_b,)

    x_t = jnp.transpose(sense)                                  # (IN_DIM, B): batch -> lanes
    if padded_b != B:
        x_t = jnp.pad(x_t, ((0, 0), (0, padded_b - B)))

    flops_per_row = 2 * (FUSED1 * IN_DIM + GATES * FEATURE_DIM
                         + CROWN_HIDDEN * MEMORY_DIM + OUT_DIM * CROWN_HIDDEN)
    cost = pl.CostEstimate(
        flops=int(flops_per_row * padded_b),
        transcendentals=int(4 * MEMORY_DIM * padded_b),
        bytes_accessed=int(4 * (padded_b * (IN_DIM + OUT_DIM) + PARAM_ROWS * SLAB_LANES)),
    )

    out_t = pl.pallas_call(
        agi_kernel,
        out_shape=jax.ShapeDtypeStruct((OUT_DIM, padded_b), jnp.float32),
        grid_spec=pltpu.PrefetchScalarGridSpec(
            num_scalar_prefetch=0,
            grid=grid,
            in_specs=[
                pl.BlockSpec((IN_DIM, block_b), lambda i: (0, i)),
                pl.BlockSpec((PARAM_ROWS, SLAB_LANES), lambda i: (0, 0)),
            ],
            out_specs=pl.BlockSpec((OUT_DIM, block_b), lambda i: (0, i)),
        ),
        compiler_params=pltpu.CompilerParams(
            dimension_semantics=("parallel",)),
        cost_estimate=cost,
    )(x_t, param_slab)

    # transpose back to (B, OUT_DIM); pure XLA layout plumbing
    return jnp.transpose(out_t)[:B]


def reference_forward(sense, p):
    """Pure-JAX reference using the FULL formulation (null-label concat, no folding)."""
    B = sense.shape[0]
    xcat = jnp.concatenate([sense, jnp.zeros((B, OUT_DIM), sense.dtype)], axis=-1)
    h = jax.nn.relu(xcat @ p["w1n"] + p["b1n"])
    thought = h @ p["w2n"] + p["b2n"]
    i = jax.nn.sigmoid(thought @ p["wi"] + p["bi"])
    g = jnp.tanh(thought @ p["wg"] + p["bg"])
    o = jax.nn.sigmoid(thought @ p["wo"] + p["bo"])
    rec = o * jnp.tanh(i * g)
    q = jax.nn.relu(jnp.concatenate([sense, rec], axis=-1) @ p["w1c"] + p["b1c"])
    return q @ p["w2c"] + p["b2c"]


if __name__ == "__main__":
    key = jax.random.PRNGKey(0)
    k_param, k_sense = jax.random.split(key)

    params = init_params(k_param)
    param_slab = pack_params(params)
    sense = jax.random.normal(k_sense, (BATCH, IN_DIM), dtype=jnp.float32)

    out = agi_gradient_forward(sense, param_slab)
    out = jax.block_until_ready(out)

    ref = reference_forward(sense, params)
    assert out.shape == (BATCH, OUT_DIM)
    assert jnp.allclose(out, ref, rtol=1e-4, atol=1e-5), "Pallas kernel mismatch vs reference"

    print("KERNEL_OK")
</pallas_src>

<mosaic_0001>
module attributes {stable_mosaic.version = 11 : i64} {
  func.func @agi_kernel(%arg0: i32, %arg1: memref<16x512xf32, #tpu.memory_space<vmem>>, %arg2: memref<320x128xf32, #tpu.memory_space<vmem>>, %arg3: memref<8x512xf32, #tpu.memory_space<vmem>>) attributes {dimension_semantics = [#tpu.dimension_semantics<parallel>], iteration_bounds = array<i64: 2>, scalar_prefetch = 0 : i64, scratch_operands = 0 : i64, tpu.core_type = #tpu.core_type<tc>, window_params = [{transform_indices = @transform_0, window_bounds = array<i64: 16, 512>}, {pipeline_mode = #tpu.pipeline_mode<synchronous>, transform_indices = @transform_1, window_bounds = array<i64: 320, 128>}, {transform_indices = @transform_2, window_bounds = array<i64: 8, 512>}]} {
    %c0 = arith.constant 0 : index
    %c0_0 = arith.constant 0 : index
    %0 = vector.load %arg1[%c0, %c0_0] : memref<16x512xf32, #tpu.memory_space<vmem>>, vector<16x512xf32>
    %c0_1 = arith.constant 0 : index
    %c0_2 = arith.constant 0 : index
    %1 = vector.load %arg2[%c0_1, %c0_2] : memref<320x128xf32, #tpu.memory_space<vmem>>, vector<48x16xf32>
    %c168 = arith.constant 168 : index
    %c0_3 = arith.constant 0 : index
    %2 = vector.load %arg2[%c168, %c0_3] : memref<320x128xf32, #tpu.memory_space<vmem>>, vector<48x1xf32>
    %cst = arith.constant dense<0.000000e+00> : vector<48x512xf32>
    %3 = tpu.matmul %1, %0, %cst {dimension_numbers = #tpu.dot_dimension_numbers<[1], [0], [0], [1], [0, 0, 1, 1], [], []>} : vector<48x16xf32>, vector<16x512xf32>, vector<48x512xf32> -> vector<48x512xf32>
    %4 = vector.broadcast %2 : vector<48x1xf32> to vector<48x512xf32>
    %5 = arith.addf %3, %4 : vector<48x512xf32>
    %6 = vector.extract_strided_slice %5 {offsets = [0, 0], sizes = [32, 512], strides = [1, 1]} : vector<48x512xf32> to vector<32x512xf32>
    %cst_4 = arith.constant 0.000000e+00 : f32
    %7 = vector.broadcast %cst_4 : f32 to vector<32x512xf32>
    %8 = arith.maximumf %6, %7 : vector<32x512xf32>
    %9 = vector.extract_strided_slice %5 {offsets = [32, 0], sizes = [16, 512], strides = [1, 1]} : vector<48x512xf32> to vector<16x512xf32>
    %c48 = arith.constant 48 : index
    %c0_5 = arith.constant 0 : index
    %10 = vector.load %arg2[%c48, %c0_5] : memref<320x128xf32, #tpu.memory_space<vmem>>, vector<96x32xf32>
    %c216 = arith.constant 216 : index
    %c0_6 = arith.constant 0 : index
    %11 = vector.load %arg2[%c216, %c0_6] : memref<320x128xf32, #tpu.memory_space<vmem>>, vector<96x1xf32>
    %cst_7 = arith.constant dense<0.000000e+00> : vector<96x512xf32>
    %12 = tpu.matmul %10, %8, %cst_7 {dimension_numbers = #tpu.dot_dimension_numbers<[1], [0], [0], [1], [0, 0, 1, 1], [], []>} : vector<96x32xf32>, vector<32x512xf32>, vector<96x512xf32> -> vector<96x512xf32>
    %13 = vector.broadcast %11 : vector<96x1xf32> to vector<96x512xf32>
    %14 = arith.addf %12, %13 : vector<96x512xf32>
    %15 = vector.extract_strided_slice %14 {offsets = [0, 0], sizes = [32, 512], strides = [1, 1]} : vector<96x512xf32> to vector<32x512xf32>
    %cst_8 = arith.constant 5.000000e-01 : f32
    %16 = vector.broadcast %cst_8 : f32 to vector<32x512xf32>
    %17 = arith.mulf %16, %15 : vector<32x512xf32>
    %18 = math.tanh %17 : vector<32x512xf32>
    %cst_9 = arith.constant 1.000000e+00 : f32
    %19 = vector.broadcast %cst_9 : f32 to vector<32x512xf32>
    %20 = arith.addf %19, %18 : vector<32x512xf32>
    %cst_10 = arith.constant 5.000000e-01 : f32
    %21 = vector.broadcast %cst_10 : f32 to vector<32x512xf32>
    %22 = arith.mulf %21, %20 : vector<32x512xf32>
    %23 = vector.extract_strided_slice %14 {offsets = [32, 0], sizes = [32, 512], strides = [1, 1]} : vector<96x512xf32> to vector<32x512xf32>
    %24 = math.tanh %23 : vector<32x512xf32>
    %25 = vector.extract_strided_slice %14 {offsets = [64, 0], sizes = [32, 512], strides = [1, 1]} : vector<96x512xf32> to vector<32x512xf32>
    %cst_11 = arith.constant 5.000000e-01 : f32
    %26 = vector.broadcast %cst_11 : f32 to vector<32x512xf32>
    %27 = arith.mulf %26, %25 : vector<32x512xf32>
    %28 = math.tanh %27 : vector<32x512xf32>
    %cst_12 = arith.constant 1.000000e+00 : f32
    %29 = vector.broadcast %cst_12 : f32 to vector<32x512xf32>
    %30 = arith.addf %29, %28 : vector<32x512xf32>
    %cst_13 = arith.constant 5.000000e-01 : f32
    %31 = vector.broadcast %cst_13 : f32 to vector<32x512xf32>
    %32 = arith.mulf %31, %30 : vector<32x512xf32>
    %33 = arith.mulf %22, %24 : vector<32x512xf32>
    %34 = math.tanh %33 : vector<32x512xf32>
    %35 = arith.mulf %32, %34 : vector<32x512xf32>
    %c144 = arith.constant 144 : index
    %c0_14 = arith.constant 0 : index
    %36 = vector.load %arg2[%c144, %c0_14] : memref<320x128xf32, #tpu.memory_space<vmem>>, vector<16x32xf32>
    %cst_15 = arith.constant dense<0.000000e+00> : vector<16x512xf32>
    %37 = tpu.matmul %36, %35, %cst_15 {dimension_numbers = #tpu.dot_dimension_numbers<[1], [0], [0], [1], [0, 0, 1, 1], [], []>} : vector<16x32xf32>, vector<32x512xf32>, vector<16x512xf32> -> vector<16x512xf32>
    %38 = arith.addf %9, %37 : vector<16x512xf32>
    %cst_16 = arith.constant 0.000000e+00 : f32
    %39 = vector.broadcast %cst_16 : f32 to vector<16x512xf32>
    %40 = arith.maximumf %38, %39 : vector<16x512xf32>
    %c160 = arith.constant 160 : index
    %c0_17 = arith.constant 0 : index
    %41 = vector.load %arg2[%c160, %c0_17] : memref<320x128xf32, #tpu.memory_space<vmem>>, vector<8x16xf32>
    %c312 = arith.constant 312 : index
    %c0_18 = arith.constant 0 : index
    %42 = vector.load %arg2[%c312, %c0_18] : memref<320x128xf32, #tpu.memory_space<vmem>>, vector<8x1xf32>
    %cst_19 = arith.constant dense<0.000000e+00> : vector<8x512xf32>
    %43 = tpu.matmul %41, %40, %cst_19 {dimension_numbers = #tpu.dot_dimension_numbers<[1], [0], [0], [1], [0, 0, 1, 1], [], []>} : vector<8x16xf32>, vector<16x512xf32>, vector<8x512xf32> -> vector<8x512xf32>
    %44 = vector.broadcast %42 : vector<8x1xf32> to vector<8x512xf32>
    %45 = arith.addf %43, %44 : vector<8x512xf32>
    %c0_20 = arith.constant 0 : index
    %c0_21 = arith.constant 0 : index
    %46 = vector.load %arg3[%c0_20, %c0_21] : memref<8x512xf32, #tpu.memory_space<vmem>>, vector<8x512xf32>
    tpu.vector_store %arg3[%c0_20, %c0_21], %45 {strides = array<i32>} : memref<8x512xf32, #tpu.memory_space<vmem>>, vector<8x512xf32>,
    return
  }
  func.func @transform_0(%arg0: i32) -> (i32, i32) {
    %c0_i32 = arith.constant 0 : i32
    %c0_i32_0 = arith.constant 0 : i32
    return %c0_i32, %arg0 : i32, i32
  }
  func.func @transform_1(%arg0: i32) -> (i32, i32) {
    %c0_i32 = arith.constant 0 : i32
    %c0_i32_0 = arith.constant 0 : i32
    %c0_i32_1 = arith.constant 0 : i32
    return %c0_i32, %c0_i32_0 : i32, i32
  }
  func.func @transform_2(%arg0: i32) -> (i32, i32) {
    %c0_i32 = arith.constant 0 : i32
    %c0_i32_0 = arith.constant 0 : i32
    return %c0_i32, %arg0 : i32, i32
  }
}

</mosaic_0001>

<llo_original>
// kernel: tpu_custom_call.1
$region0: #{tpu_custom_call.1}
  #allocation0 [shape = 'u32[]', space=smem, size = 0x4, offset = 0x4, fixed_abs, tag = 'smem constant byte address 0x4 - core index']
  #allocation1 [shape = 'u32[144,128]{1,0:T(1,128)}', space=vmem, size = 0x12000, scoped, tag = 'internal scratch']
  %s0 = inlined_call_operand.hbm [shape: f32[16,1024], index: 0, kind: input, shape index: {}]
  %s1 = inlined_call_operand.hbm [shape: f32[320,128], index: 1, kind: input, shape index: {}]
  %s2 = inlined_call_operand.hbm [shape: f32[8,1024], index: 2, kind: output, shape index: {}]
  %s3 = sld [smem:[#allocation0]]
  $region49: #{tpu_custom_call.1} parent=0
    _
  %s5 = ssub.s32 1, %s3
  %s6 = scalar_select 0, %s5, %s3
  $region1: #{tpu_custom_call.1} parent=0
    #allocation2 [shape = 'u8[65536]{0}', space=vmem, size = 0x10000, scoped, tag = 'input window, operand 0']
    #allocation3 [shape = 's32[2]{0}', space=sflag, size = 0x8, scoped, tag = 'scoped memory for tpu_custom_call.1']
    #allocation4 [shape = 's32[2]{0}', space=sflag, size = 0x8, scoped, tag = 'scoped memory for tpu_custom_call.1']
    #allocation5 [shape = 'u8[163840]{0}', space=vmem, size = 0x28000, scoped, tag = 'input window, operand 1, single buffered']
    #allocation6 [shape = 's32[1]{0}', space=sflag, size = 0x4, scoped, tag = 'scoped memory for tpu_custom_call.1']
    #allocation7 [shape = 'u8[32768]{0}', space=vmem, size = 0x8000, scoped, tag = 'output window, operand 0']
    %7 = vsyncpa [#allocation3], 0
    %s8 = scalar_lea.sflag [#allocation3], 1
    %9 = vsyncpa %s8, 0
    %10 = vsyncpa [#allocation6], 0
    %11 = vsyncpa [#allocation4], 0
    %s12 = scalar_lea.sflag [#allocation4], 1
    %13 = vsyncpa %s12, 0
    loop: start=0, step=1, limit=4
    $region2: #{tpu_custom_call.1} parent=1 // loop_pre_header
      _
    $region3: #{tpu_custom_call.1} parent=1 // loop_header
      %s15 = sphi 0, %s19
      %p16 = scmp.ge.s32.totalorder %s15, 4
      %s25 = sphi 0, %s27
      %s28 = sphi 0, %s25
      %s29 = sphi 0, %s28
      %s45 = sphi 0, %s29
      %s49 = sphi 0, %s49
      %s51 = sphi 0, %s49
      %s52 = sphi 0, %s51
      %s66 = sphi 0, %s52
      %s72 = sphi 0, %s74
      %s75 = sphi 0, %s72
      %s76 = sphi 0, %s75
      %s92 = sphi 0, %s76
    $region4: #{tpu_custom_call.1} parent=1 // loop_header_branch
      %18 = sbr.rel (%p16) target = $region8
    $region5: #{tpu_custom_call.1} parent=1 // loop_body
      %s20 = ssub.s32 %s15, 1
      %s21 = ssub.s32 %s15, 2
      %s22 = sadd.s32 %s15, 1
      %s23 = ssub.s32 %s15, %s22
      %p24 = scmp.eq.s32.totalorder %s23, 0
      %s26 = sadd.s32 %s25, 1
      %s27 = scalar_select %p24, %s25, %s26
      %p30 = pneg %p24
      %p31 = scmp.eq.s32.totalorder %s15, 1
      %p32 = por %p30, %p31
      %p33 = scmp.ne.s32.totalorder %s25, %s28
      %p34 = scmp.eq.s32.totalorder %s15, 0
      %p35 = por %p33, %p34
      %p36 = scmp.ne.s32.totalorder %s25, %s28
      %p37 = scmp.eq.s32.totalorder %s20, 1
      %p38 = por %p36, %p37
      %p39 = scmp.ne.s32.totalorder %s28, %s29
      %p40 = scmp.eq.s32.totalorder %s20, 0
      %p41 = por %p39, %p40
      %p42 = scmp.ne.s32.totalorder %s28, %s29
      %p43 = scmp.eq.s32.totalorder %s21, 1
      %p44 = por %p42, %p43
      %p46 = scmp.ne.s32.totalorder %s29, %s45
      %p47 = scmp.eq.s32.totalorder %s21, 0
      %p48 = por %p46, %p47
      %s50 = sadd.s32 %s49, 1
      %p53 = scmp.eq.s32.totalorder %s15, 1
      %p54 = scmp.ne.s32.totalorder %s49, %s51
      %p55 = scmp.eq.s32.totalorder %s15, 0
      %p56 = por %p54, %p55
      %p57 = scmp.ne.s32.totalorder %s49, %s51
      %p58 = scmp.eq.s32.totalorder %s20, 1
      %p59 = por %p57, %p58
      %p60 = scmp.ne.s32.totalorder %s51, %s52
      %p61 = scmp.eq.s32.totalorder %s20, 0
      %p62 = por %p60, %p61
      %p63 = scmp.ne.s32.totalorder %s51, %s52
      %p64 = scmp.eq.s32.totalorder %s21, 1
      %p65 = por %p63, %p64
      %p67 = scmp.ne.s32.totalorder %s52, %s66
      %p68 = scmp.eq.s32.totalorder %s21, 0
      %p69 = por %p67, %p68
      %s70 = ssub.s32 %s15, %s22
      %p71 = scmp.eq.s32.totalorder %s70, 0
      %s73 = sadd.s32 %s72, 1
      %s74 = scalar_select %p71, %s72, %s73
      %p77 = pneg %p71
      %p78 = scmp.eq.s32.totalorder %s15, 1
      %p79 = por %p77, %p78
      %p80 = scmp.ne.s32.totalorder %s72, %s75
      %p81 = scmp.eq.s32.totalorder %s15, 0
      %p82 = por %p80, %p81
      %p83 = scmp.ne.s32.totalorder %s72, %s75
      %p84 = scmp.eq.s32.totalorder %s20, 1
      %p85 = por %p83, %p84
      %p86 = scmp.ne.s32.totalorder %s75, %s76
      %p87 = scmp.eq.s32.totalorder %s20, 0
      %p88 = por %p86, %p87
      %p89 = scmp.ne.s32.totalorder %s75, %s76
      %p90 = scmp.eq.s32.totalorder %s21, 1
      %p91 = por %p89, %p90
      %p93 = scmp.ne.s32.totalorder %s76, %s92
      %p94 = scmp.eq.s32.totalorder %s21, 0
      %p95 = por %p93, %p94
      %p96 = scmp.le.s32.totalorder 1, %s15
      %p97 = scmp.lt.s32.totalorder %s15, 3
      %p98 = pnand %p96, %p97
      %p99 = pneg %p98
      // Predicated region
      $region9: #{tpu_custom_call.1} parent=5 // pred_check
        _
      $region10: #{tpu_custom_call.1} parent=5 // pred_check_branch
        %101 = sbr.rel (%p98) target = $region12
      $region11: #{tpu_custom_call.1} parent=5 // pred_region
        %s102 = ssub.s32 %s15, 1
        // Predicated region
        $region13: #{tpu_custom_call.1} parent=11 // pred_check
          %p103 = pneg %p62
        $region14: #{tpu_custom_call.1} parent=11 // pred_check_branch
          %105 = sbr.rel (%p103) target = $region16
        $region15: #{tpu_custom_call.1} parent=11 // pred_region
          %s107 = ssub.s32 5120, 5120
          %108 = vsyncadd [#allocation6], %s107
          %s109 = sshll.u32 [#allocation5], 4
          %s110 = int_to_ptr.vmem [resolvable:$true] %s109
          %115 = dma.hbm_to_vmem [thread:$0]  %s1, 5120, %s110, [#allocation6], 128, 128, 8
        $region16: #{tpu_custom_call.1} parent=11 // pred_fallthru
          _
      $region12: #{tpu_custom_call.1} parent=5 // pred_fallthru
        _
      %p116 = scmp.lt.s32.totalorder %s15, 2
      // Predicated region
      $region17: #{tpu_custom_call.1} parent=5 // pred_check
        %p117 = pneg %p116
      $region18: #{tpu_custom_call.1} parent=5 // pred_check_branch
        %119 = sbr.rel (%p117) target = $region20
      $region19: #{tpu_custom_call.1} parent=5 // pred_region
        // Predicated region
        $region21: #{tpu_custom_call.1} parent=19 // pred_check
          %p120 = pneg %p35
        $region22: #{tpu_custom_call.1} parent=19 // pred_check_branch
          %122 = sbr.rel (%p120) target = $region24
        $region23: #{tpu_custom_call.1} parent=19 // pred_region
          %s123 = sand.u32 %s25, 1
          %s124 = scalar_lea.sflag [#allocation3], %s123
          %s125 = sand.u32 %s25, 1
          %s126 = smul.addr %s125, 64
          %s127 = scalar_lea.vmem [#allocation2], %s126
          %s128 = smul.u32 4, %s15
          %s130 = ssub.s32 1024, 1024
          %131 = vsyncadd %s124, %s130
          %s132 = smul.addr %s128, 128
          %s133 = scalar_lea.hbm %s0, %s132
          %s134 = sshll.u32 %s127, 4
          %s135 = int_to_ptr.vmem [resolvable:$true] %s134
          %140 = dma.hbm_to_vmem [thread:$0]  %s133, 1024, %s135, %s124, 1024, 512, 32
        $region24: #{tpu_custom_call.1} parent=19 // pred_fallthru
          _
      $region20: #{tpu_custom_call.1} parent=5 // pred_fallthru
        _
      %p141 = scmp.le.s32.totalorder 1, %s15
      %p142 = scmp.lt.s32.totalorder %s15, 3
      %p143 = pnand %p141, %p142
      %p144 = pneg %p143
      // Predicated region
      $region25: #{tpu_custom_call.1} parent=5 // pred_check
        _
      $region26: #{tpu_custom_call.1} parent=5 // pred_check_branch
        %146 = sbr.rel (%p143) target = $region28
      $region27: #{tpu_custom_call.1} parent=5 // pred_region
        %s147 = ssub.s32 %s15, 1
        %s148 = sand.u32 %s28, 1
        %s149 = scalar_lea.sflag [#allocation3], %s148
        %s150 = sand.u32 %s28, 1
        %s151 = smul.addr %s150, 64
        %s152 = scalar_lea.vmem [#allocation2], %s151
        // Predicated region
        $region29: #{tpu_custom_call.1} parent=27 // pred_check
          %p153 = pneg %p41
        $region30: #{tpu_custom_call.1} parent=27 // pred_check_branch
          %155 = sbr.rel (%p153) target = $region32
        $region31: #{tpu_custom_call.1} parent=27 // pred_region
          %156 = dma.done %s149, 1024
        $region32: #{tpu_custom_call.1} parent=27 // pred_fallthru
          _
        // Predicated region
        $region33: #{tpu_custom_call.1} parent=27 // pred_check
          %p157 = pneg %p62
        $region34: #{tpu_custom_call.1} parent=27 // pred_check_branch
          %159 = sbr.rel (%p157) target = $region36
        $region35: #{tpu_custom_call.1} parent=27 // pred_region
          %160 = dma.done [#allocation6], 5120
        $region36: #{tpu_custom_call.1} parent=27 // pred_fallthru
          _
        %s161 = sand.u32 %s28, 1
        %s162 = scalar_lea.sflag [#allocation3], %s161
        %s163 = sand.u32 %s28, 1
        %s164 = smul.addr %s163, 64
        %s165 = scalar_lea.vmem [#allocation2], %s164
        %p166 = pneg %p41
        %p167 = pneg %p38
        %p168 = pneg %p62
        %p169 = pneg %p59
        %p170 = pneg %p88
        %p171 = pneg %p85
        %s172 = sand.u32 %s75, 1
        %s173 = scalar_lea.sflag [#allocation4], %s172
        %s174 = sand.u32 %s75, 1
        %s175 = smul.addr %s174, 32
        %s176 = scalar_lea.vmem [#allocation7], %s175
        %s177 = smul.u32 4, %s20
        %s178 = smul.u32 4, %s20
        %v179 = vld [vmem:[%s152] sm:$0xff]
        %v180 = vld [vmem:[%s152 + $0x8] sm:$0xff]
        %v181 = vld [vmem:[%s152 + $0x10] sm:$0xff]
        %v182 = vld [vmem:[%s152 + $0x18] sm:$0xff]
        %v183 = vld [vmem:[%s152 + $0x20] sm:$0xff]
        %v184 = vld [vmem:[%s152 + $0x28] sm:$0xff]
        %v185 = vld [vmem:[%s152 + $0x30] sm:$0xff]
        %v186 = vld [vmem:[%s152 + $0x38] sm:$0xff]
        %v187 = vld [vmem:[#allocation5] sm:$0xff]
        %v188 = vld [vmem:[#allocation5 + $0x8] sm:$0xff]
        %v189 = vld [vmem:[#allocation5 + $0x10] sm:$0xff]
        %v190 = vld [vmem:[#allocation5 + $0x18] sm:$0xff]
        %v191 = vld [vmem:[#allocation5 + $0x20] sm:$0xff]
        %v192 = vld [vmem:[#allocation5 + $0x28] sm:$0xff]
        %v193 = vld [vmem:[#allocation5 + $0xa8] sm:$0xff]
        %v194 = vld [vmem:[#allocation5 + $0xb0] sm:$0xff]
        %v195 = vld [vmem:[#allocation5 + $0xb8] sm:$0xff]
        %v196 = vld [vmem:[#allocation5 + $0xc0] sm:$0xff]
        %v197 = vld [vmem:[#allocation5 + $0xc8] sm:$0xff]
        %v198 = vld [vmem:[#allocation5 + $0xd0] sm:$0xff]
        %200 = vset.pattern.permute.xlu0 0
        %201 = vperm.xlu0 %200, %v193
        %v202 = vpop.permute.xlu0 %201
        %205 = vset.pattern.permute.xlu0 0
        %206 = vperm.xlu0 %205, %v194
        %v207 = vpop.permute.xlu0 %206
        %210 = vset.pattern.permute.xlu0 0
        %211 = vperm.xlu0 %210, %v195
        %v212 = vpop.permute.xlu0 %211
        %215 = vset.pattern.permute.xlu0 0
        %216 = vperm.xlu0 %215, %v196
        %v217 = vpop.permute.xlu0 %216
        %220 = vset.pattern.permute.xlu0 0
        %221 = vperm.xlu0 %220, %v197
        %v222 = vpop.permute.xlu0 %221
        %225 = vset.pattern.permute.xlu0 0
        %226 = vperm.xlu0 %225, %v198
        %v227 = vpop.permute.xlu0 %226
        %vm229 = vcmask 130048
        %v231 = vsel %vm229, %v187, 0
        %v234 = vsel %vm229, %v188, 0
        %v237 = vsel %vm229, %v189, 0
        %v240 = vsel %vm229, %v190, 0
        %v243 = vsel %vm229, %v191, 0
        %v246 = vsel %vm229, %v192, 0
        %248 = vmatprep.subr.mxu0 %v180
        %249 = vmatpush1.msra.mxu0 %v179
        %250 = vmatprep.subr.mxu0 %v184
        %251 = vmatpush1.msra.mxu0 %v183
        %252 = vmatprep.subr.mxu0 0.0
        %253 = vmatpush1.msra.mxu0 0.0
        %254 = vmatprep.subr.mxu0 0.0
        %255 = vmatpush1.msra.mxu0 0.0
        %256 = vmatprep.subr.mxu0 0.0
        %257 = vmatpush1.msra.mxu0 0.0
        %258 = vmatprep.subr.mxu0 0.0
        %259 = vmatpush1.msra.mxu0 0.0
        %260 = vmatprep.subr.mxu0 0.0
        %261 = vmatpush1.msra.mxu0 0.0
        %262 = vmatprep.subr.mxu0 0.0
        %263 = vmatpush1.msra.mxu0 0.0
        %264 = vmatprep.subr.mxu0 0.0
        %265 = vmatpush1.msra.mxu0 0.0
        %266 = vmatprep.subr.mxu0 0.0
        %267 = vmatpush1.msra.mxu0 0.0
        %268 = vmatprep.subr.mxu0 0.0
        %269 = vmatpush1.msra.mxu0 0.0
        %270 = vmatprep.subr.mxu0 0.0
        %271 = vmatpush1.msra.mxu0 0.0
        %272 = vmatprep.subr.mxu0 0.0
        %273 = vmatpush1.msra.mxu0 0.0
        %274 = vmatprep.subr.mxu0 0.0
        %275 = vmatpush1.msra.mxu0 0.0
        %276 = vmatprep.subr.mxu0 0.0
        %277 = vmatpush1.msra.mxu0 0.0
        %278 = vmatprep.subr.mxu0 0.0
        %279 = vmatpush1.msra.mxu0 0.0
        %280 = vmatprep.subr.mxu0 0.0
        %281 = vmatpush1.msra.mxu0 0.0
        %282 = vmatprep.subr.mxu0 0.0
        %283 = vmatpush1.msra.mxu0 0.0
        %284 = vmatprep.subr.mxu0 0.0
        %285 = vmatpush1.msra.mxu0 0.0
        %286 = vmatprep.subr.mxu0 0.0
        %287 = vmatpush1.msra.mxu0 0.0
        %288 = vmatprep.subr.mxu0 0.0
        %289 = vmatpush1.msra.mxu0 0.0
        %290 = vmatprep.subr.mxu0 0.0
        %291 = vmatpush1.msra.mxu0 0.0
        %292 = vmatprep.subr.mxu0 0.0
        %293 = vmatpush1.msra.mxu0 0.0
        %294 = vmatprep.subr.mxu0 0.0
        %295 = vmatpush1.msra.mxu0 0.0
        %296 = vmatprep.subr.mxu0 0.0
        %297 = vmatpush1.msra.mxu0 0.0
        %298 = vmatprep.subr.mxu0 0.0
        %299 = vmatpush1.msra.mxu0 0.0
        %300 = vmatprep.subr.mxu0 0.0
        %301 = vmatpush1.msra.mxu0 0.0
        %302 = vmatprep.subr.mxu0 0.0
        %303 = vmatpush1.msra.mxu0 0.0
        %304 = vmatprep.subr.mxu0 0.0
        %305 = vmatpush1.msra.mxu0 0.0
        %306 = vmatprep.subr.mxu0 0.0
        %307 = vmatpush1.msra.mxu0 0.0
        %308 = vmatprep.subr.mxu0 0.0
        %309 = vmatpush1.msra.mxu0 0.0
        %310 = vmatprep.subr.mxu0 0.0
        %311 = vmatpush1.msra.mxu0 0.0
        %312 = vmatprep.mubr.f32.mxu0 0.0
        %313 = vmatmul.mubr.f32.gmra.mrb[0].mxu0 %v231
        %v314 = vpop.f32.mrb[0].mxu0
        %v315 = vadd.f32 %v202, %v314
        %v316 = vpop.f32.mrb[0].mxu0
        %v317 = vadd.f32 %v202, %v316
        %318 = vmatprep.mubr.f32.mxu0 0.0
        %319 = vmatmul.mubr.f32.gmra.mrb[0].mxu0 %v234
        %v320 = vpop.f32.mrb[0].mxu0
        %v321 = vadd.f32 %v207, %v320
        %v322 = vpop.f32.mrb[0].mxu0
        %v323 = vadd.f32 %v207, %v322
        %324 = vmatprep.mubr.f32.mxu0 0.0
        %325 = vmatmul.mubr.f32.gmra.mrb[0].mxu0 %v237
        %v326 = vpop.f32.mrb[0].mxu0
        %v327 = vadd.f32 %v212, %v326
        %v328 = vpop.f32.mrb[0].mxu0
        %v329 = vadd.f32 %v212, %v328
        %330 = vmatprep.mubr.f32.mxu0 0.0
        %331 = vmatmul.mubr.f32.gmra.mrb[0].mxu0 %v240
        %v332 = vpop.f32.mrb[0].mxu0
        %v333 = vadd.f32 %v217, %v332
        %v334 = vpop.f32.mrb[0].mxu0
        %v335 = vadd.f32 %v217, %v334
        %336 = vmatprep.mubr.f32.mxu0 0.0
        %337 = vmatmul.mubr.f32.gmra.mrb[0].mxu0 %v243
        %v338 = vpop.f32.mrb[0].mxu0
        %v339 = vadd.f32 %v222, %v338
        %v340 = vpop.f32.mrb[0].mxu0
        %v341 = vadd.f32 %v222, %v340
        %342 = vmatprep.mubr.f32.mxu0 0.0
        %343 = vmatmul.mubr.f32.gmra.mrb[0].mxu0 %v246
        %v344 = vpop.f32.mrb[0].mxu0
        %v345 = vadd.f32 %v227, %v344
        %v346 = vpop.f32.mrb[0].mxu0
        %v347 = vadd.f32 %v227, %v346
        %348 = vdwg.mxu0
        %349 = vmatprep.subr.mxu0 %v182
        %350 = vmatpush1.msra.mxu0 %v181
        %351 = vmatprep.subr.mxu0 %v186
        %352 = vmatpush1.msra.mxu0 %v185
        %353 = vmatprep.subr.mxu0 0.0
        %354 = vmatpush1.msra.mxu0 0.0
        %355 = vmatprep.subr.mxu0 0.0
        %356 = vmatpush1.msra.mxu0 0.0
        %357 = vmatprep.subr.mxu0 0.0
        %358 = vmatpush1.msra.mxu0 0.0
        %359 = vmatprep.subr.mxu0 0.0
        %360 = vmatpush1.msra.mxu0 0.0
        %361 = vmatprep.subr.mxu0 0.0
        %362 = vmatpush1.msra.mxu0 0.0
        %363 = vmatprep.subr.mxu0 0.0
        %364 = vmatpush1.msra.mxu0 0.0
        %365 = vmatprep.subr.mxu0 0.0
        %366 = vmatpush1.msra.mxu0 0.0
        %367 = vmatprep.subr.mxu0 0.0
        %368 = vmatpush1.msra.mxu0 0.0
        %369 = vmatprep.subr.mxu0 0.0
        %370 = vmatpush1.msra.mxu0 0.0
        %371 = vmatprep.subr.mxu0 0.0
        %372 = vmatpush1.msra.mxu0 0.0
        %373 = vmatprep.subr.mxu0 0.0
        %374 = vmatpush1.msra.mxu0 0.0
        %375 = vmatprep.subr.mxu0 0.0
        %376 = vmatpush1.msra.mxu0 0.0
        %377 = vmatprep.subr.mxu0 0.0
        %378 = vmatpush1.msra.mxu0 0.0
        %379 = vmatprep.subr.mxu0 0.0
        %380 = vmatpush1.msra.mxu0 0.0
        %381 = vmatprep.subr.mxu0 0.0
        %382 = vmatpush1.msra.mxu0 0.0
        %383 = vmatprep.subr.mxu0 0.0
        %384 = vmatpush1.msra.mxu0 0.0
        %385 = vmatprep.subr.mxu0 0.0
        %386 = vmatpush1.msra.mxu0 0.0
        %387 = vmatprep.subr.mxu0 0.0
        %388 = vmatpush1.msra.mxu0 0.0
        %389 = vmatprep.subr.mxu0 0.0
        %390 = vmatpush1.msra.mxu0 0.0
        %391 = vmatprep.subr.mxu0 0.0
        %392 = vmatpush1.msra.mxu0 0.0
        %393 = vmatprep.subr.mxu0 0.0
        %394 = vmatpush1.msra.mxu0 0.0
        %395 = vmatprep.subr.mxu0 0.0
        %396 = vmatpush1.msra.mxu0 0.0
        %397 = vmatprep.subr.mxu0 0.0
        %398 = vmatpush1.msra.mxu0 0.0
        %399 = vmatprep.subr.mxu0 0.0
        %400 = vmatpush1.msra.mxu0 0.0
        %401 = vmatprep.subr.mxu0 0.0
        %402 = vmatpush1.msra.mxu0 0.0
        %403 = vmatprep.subr.mxu0 0.0
        %404 = vmatpush1.msra.mxu0 0.0
        %405 = vmatprep.subr.mxu0 0.0
        %406 = vmatpush1.msra.mxu0 0.0
        %407 = vmatprep.subr.mxu0 0.0
        %408 = vmatpush1.msra.mxu0 0.0
        %409 = vmatprep.subr.mxu0 0.0
        %410 = vmatpush1.msra.mxu0 0.0
        %411 = vmatprep.subr.mxu0 0.0
        %412 = vmatpush1.msra.mxu0 0.0
        %413 = vmatprep.mubr.f32.mxu0 0.0
        %414 = vmatmul.mubr.f32.gmra.mrb[0].mxu0 %v231
        %v415 = vpop.f32.mrb[0].mxu0
        %v416 = vadd.f32 %v202, %v415
        %v417 = vpop.f32.mrb[0].mxu0
        %v418 = vadd.f32 %v202, %v417
        %419 = vmatprep.mubr.f32.mxu0 0.0
        %420 = vmatmul.mubr.f32.gmra.mrb[0].mxu0 %v234
        %v421 = vpop.f32.mrb[0].mxu0
        %v422 = vadd.f32 %v207, %v421
        %v423 = vpop.f32.mrb[0].mxu0
        %v424 = vadd.f32 %v207, %v423
        %425 = vmatprep.mubr.f32.mxu0 0.0
        %426 = vmatmul.mubr.f32.gmra.mrb[0].mxu0 %v237
        %v427 = vpop.f32.mrb[0].mxu0
        %v428 = vadd.f32 %v212, %v427
        %v429 = vpop.f32.mrb[0].mxu0
        %v430 = vadd.f32 %v212, %v429
        %431 = vmatprep.mubr.f32.mxu0 0.0
        %432 = vmatmul.mubr.f32.gmra.mrb[0].mxu0 %v240
        %v433 = vpop.f32.mrb[0].mxu0
        %v434 = vadd.f32 %v217, %v433
        %v435 = vpop.f32.mrb[0].mxu0
        %v436 = vadd.f32 %v217, %v435
        %437 = vmatprep.mubr.f32.mxu0 0.0
        %438 = vmatmul.mubr.f32.gmra.mrb[0].mxu0 %v243
        %v439 = vpop.f32.mrb[0].mxu0
        %v440 = vadd.f32 %v222, %v439
        %v441 = vpop.f32.mrb[0].mxu0
        %v442 = vadd.f32 %v222, %v441
        %443 = vmatprep.mubr.f32.mxu0 0.0
        %444 = vmatmul.mubr.f32.gmra.mrb[0].mxu0 %v246
        %v445 = vpop.f32.mrb[0].mxu0
        %v446 = vadd.f32 %v227, %v445
        %v447 = vpop.f32.mrb[0].mxu0
        %v448 = vadd.f32 %v227, %v447
        %449 = vdwg.mxu0
        %v450 = vmax.f32 %v315, 0.0
        %v451 = vmax.f32 %v317, 0.0
        %v452 = vmax.f32 %v416, 0.0
        %v453 = vmax.f32 %v418, 0.0
        %v454 = vmax.f32 %v321, 0.0
        %v455 = vmax.f32 %v323, 0.0
        %v456 = vmax.f32 %v422, 0.0
        %v457 = vmax.f32 %v424, 0.0
        %v458 = vmax.f32 %v327, 0.0
        %v459 = vmax.f32 %v329, 0.0
        %v460 = vmax.f32 %v428, 0.0
        %v461 = vmax.f32 %v430, 0.0
        %v462 = vmax.f32 %v333, 0.0
        %v463 = vmax.f32 %v335, 0.0
        %v464 = vmax.f32 %v434, 0.0
        %v465 = vmax.f32 %v436, 0.0
        %v466 = vld [vmem:[#allocation5 + $0x30] sm:$0xff]
        %v467 = vld [vmem:[#allocation5 + $0x38] sm:$0xff]
        %v468 = vld [vmem:[#allocation5 + $0x40] sm:$0xff]
        %v469 = vld [vmem:[#allocation5 + $0x48] sm:$0xff]
        %v470 = vld [vmem:[#allocation5 + $0x50] sm:$0xff]
        %v471 = vld [vmem:[#allocation5 + $0x58] sm:$0xff]
        %v472 = vld [vmem:[#allocation5 + $0x60] sm:$0xff]
        %v473 = vld [vmem:[#allocation5 + $0x68] sm:$0xff]
        %v474 = vld [vmem:[#allocation5 + $0x70] sm:$0xff]
        %v475 = vld [vmem:[#allocation5 + $0x78] sm:$0xff]
        %v476 = vld [vmem:[#allocation5 + $0x80] sm:$0xff]
        %v477 = vld [vmem:[#allocation5 + $0x88] sm:$0xff]
        %v478 = vld [vmem:[#allocation5 + $0xd8] sm:$0xff]
        %v479 = vld [vmem:[#allocation5 + $0xe0] sm:$0xff]
        %v480 = vld [vmem:[#allocation5 + $0xe8] sm:$0xff]
        %v481 = vld [vmem:[#allocation5 + $0xf0] sm:$0xff]
        %v482 = vld [vmem:[#allocation5 + $0xf8] sm:$0xff]
        %v483 = vld [vmem:[#allocation5 + $0x100] sm:$0xff]
        %v484 = vld [vmem:[#allocation5 + $0x108] sm:$0xff]
        %v485 = vld [vmem:[#allocation5 + $0x110] sm:$0xff]
        %v486 = vld [vmem:[#allocation5 + $0x118] sm:$0xff]
        %v487 = vld [vmem:[#allocation5 + $0x120] sm:$0xff]
        %v488 = vld [vmem:[#allocation5 + $0x128] sm:$0xff]
        %v489 = vld [vmem:[#allocation5 + $0x130] sm:$0xff]
        %491 = vset.pattern.permute.xlu0 0
        %492 = vperm.xlu0 %491, %v478
        %v493 = vpop.permute.xlu0 %492
        %496 = vset.pattern.permute.xlu0 0
        %497 = vperm.xlu0 %496, %v479
        %v498 = vpop.permute.xlu0 %497
        %501 = vset.pattern.permute.xlu0 0
        %502 = vperm.xlu0 %501, %v480
        %v503 = vpop.permute.xlu0 %502
        %506 = vset.pattern.permute.xlu0 0
        %507 = vperm.xlu0 %506, %v481
        %v508 = vpop.permute.xlu0 %507
        %511 = vset.pattern.permute.xlu0 0
        %512 = vperm.xlu0 %511, %v482
        %v513 = vpop.permute.xlu0 %512
        %516 = vset.pattern.permute.xlu0 0
        %517 = vperm.xlu0 %516, %v483
        %v518 = vpop.permute.xlu0 %517
        %521 = vset.pattern.permute.xlu0 0
        %522 = vperm.xlu0 %521, %v484
        %v523 = vpop.permute.xlu0 %522
        %526 = vset.pattern.permute.xlu0 0
        %527 = vperm.xlu0 %526, %v485
        %v528 = vpop.permute.xlu0 %527
        %531 = vset.pattern.permute.xlu0 0
        %532 = vperm.xlu0 %531, %v486
        %v533 = vpop.permute.xlu0 %532
        %536 = vset.pattern.permute.xlu0 0
        %537 = vperm.xlu0 %536, %v487
        %v538 = vpop.permute.xlu0 %537
        %541 = vset.pattern.permute.xlu0 0
        %542 = vperm.xlu0 %541, %v488
        %v543 = vpop.permute.xlu0 %542
        %546 = vset.pattern.permute.xlu0 0
        %547 = vperm.xlu0 %546, %v489
        %v548 = vpop.permute.xlu0 %547
        %vm550 = vcmask 261120
        %v552 = vsel %vm550, %v466, 0
        %v555 = vsel %vm550, %v467, 0
        %v558 = vsel %vm550, %v468, 0
        %v561 = vsel %vm550, %v469, 0
        %v564 = vsel %vm550, %v470, 0
        %v567 = vsel %vm550, %v471, 0
        %v570 = vsel %vm550, %v472, 0
        %v573 = vsel %vm550, %v473, 0
        %v576 = vsel %vm550, %v474, 0
        %v579 = vsel %vm550, %v475, 0
        %v582 = vsel %vm550, %v476, 0
        %v585 = vsel %vm550, %v477, 0
        %587 = vmatprep.subr.mxu0 %v451
        %588 = vmatpush1.msra.mxu0 %v450
        %589 = vmatprep.subr.mxu0 %v455
        %590 = vmatpush1.msra.mxu0 %v454
        %591 = vmatprep.subr.mxu0 %v459
        %592 = vmatpush1.msra.mxu0 %v458
        %593 = vmatprep.subr.mxu0 %v463
        %594 = vmatpush1.msra.mxu0 %v462
        %595 = vmatprep.subr.mxu0 0.0
        %596 = vmatpush1.msra.mxu0 0.0
        %597 = vmatprep.subr.mxu0 0.0
        %598 = vmatpush1.msra.mxu0 0.0
        %599 = vmatprep.subr.mxu0 0.0
        %600 = vmatpush1.msra.mxu0 0.0
        %601 = vmatprep.subr.mxu0 0.0
        %602 = vmatpush1.msra.mxu0 0.0
        %603 = vmatprep.subr.mxu0 0.0
        %604 = vmatpush1.msra.mxu0 0.0
        %605 = vmatprep.subr.mxu0 0.0
        %606 = vmatpush1.msra.mxu0 0.0
        %607 = vmatprep.subr.mxu0 0.0
        %608 = vmatpush1.msra.mxu0 0.0
        %609 = vmatprep.subr.mxu0 0.0
        %610 = vmatpush1.msra.mxu0 0.0
        %611 = vmatprep.subr.mxu0 0.0
        %612 = vmatpush1.msra.mxu0 0.0
        %613 = vmatprep.subr.mxu0 0.0
        %614 = vmatpush1.msra.mxu0 0.0
        %615 = vmatprep.subr.mxu0 0.0
        %616 = vmatpush1.msra.mxu0 0.0
        %617 = vmatprep.subr.mxu0 0.0
        %618 = vmatpush1.msra.mxu0 0.0
        %619 = vmatprep.subr.mxu0 0.0
        %620 = vmatpush1.msra.mxu0 0.0
        %621 = vmatprep.subr.mxu0 0.0
        %622 = vmatpush1.msra.mxu0 0.0
        %623 = vmatprep.subr.mxu0 0.0
        %624 = vmatpush1.msra.mxu0 0.0
        %625 = vmatprep.subr.mxu0 0.0
        %626 = vmatpush1.msra.mxu0 0.0
        %627 = vmatprep.subr.mxu0 0.0
        %628 = vmatpush1.msra.mxu0 0.0
        %629 = vmatprep.subr.mxu0 0.0
        %630 = vmatpush1.msra.mxu0 0.0
        %631 = vmatprep.subr.mxu0 0.0
        %632 = vmatpush1.msra.mxu0 0.0
        %633 = vmatprep.subr.mxu0 0.0
        %634 = vmatpush1.msra.mxu0 0.0
        %635 = vmatprep.subr.mxu0 0.0
        %636 = vmatpush1.msra.mxu0 0.0
        %637 = vmatprep.subr.mxu0 0.0
        %638 = vmatpush1.msra.mxu0 0.0
        %639 = vmatprep.subr.mxu0 0.0
        %640 = vmatpush1.msra.mxu0 0.0
        %641 = vmatprep.subr.mxu0 0.0
        %642 = vmatpush1.msra.mxu0 0.0
        %643 = vmatprep.subr.mxu0 0.0
        %644 = vmatpush1.msra.mxu0 0.0
        %645 = vmatprep.subr.mxu0 0.0
        %646 = vmatpush1.msra.mxu0 0.0
        %647 = vmatprep.subr.mxu0 0.0
        %648 = vmatpush1.msra.mxu0 0.0
        %649 = vmatprep.subr.mxu0 0.0
        %650 = vmatpush1.msra.mxu0 0.0
        %651 = vmatprep.mubr.f32.mxu0 0.0
        %652 = vmatmul.mubr.f32.gmra.mrb[0].mxu0 %v552
        %v653 = vpop.f32.mrb[0].mxu0
        %v654 = vadd.f32 %v493, %v653
        %v655 = vpop.f32.mrb[0].mxu0
        %v656 = vadd.f32 %v493, %v655
        %657 = vmatprep.mubr.f32.mxu0 0.0
        %658 = vmatmul.mubr.f32.gmra.mrb[0].mxu0 %v555
        %v659 = vpop.f32.mrb[0].mxu0
        %v660 = vadd.f32 %v498, %v659
        %v661 = vpop.f32.mrb[0].mxu0
        %v662 = vadd.f32 %v498, %v661
        %663 = vmatprep.mubr.f32.mxu0 0.0
        %664 = vmatmul.mubr.f32.gmra.mrb[0].mxu0 %v558
        %v665 = vpop.f32.mrb[0].mxu0
        %v666 = vadd.f32 %v503, %v665
        %v667 = vpop.f32.mrb[0].mxu0
        %v668 = vadd.f32 %v503, %v667
        %669 = vmatprep.mubr.f32.mxu0 0.0
        %670 = vmatmul.mubr.f32.gmra.mrb[0].mxu0 %v561
        %v671 = vpop.f32.mrb[0].mxu0
        %v672 = vadd.f32 %v508, %v671
        %v673 = vpop.f32.mrb[0].mxu0
        %v674 = vadd.f32 %v508, %v673
        %675 = vmatprep.mubr.f32.mxu0 0.0
        %676 = vmatmul.mubr.f32.gmra.mrb[0].mxu0 %v564
        %v677 = vpop.f32.mrb[0].mxu0
        %v678 = vadd.f32 %v513, %v677
        %v679 = vpop.f32.mrb[0].mxu0
        %v680 = vadd.f32 %v513, %v679
        %681 = vmatprep.mubr.f32.mxu0 0.0
        %682 = vmatmul.mubr.f32.gmra.mrb[0].mxu0 %v567
        %v683 = vpop.f32.mrb[0].mxu0
        %v684 = vadd.f32 %v518, %v683
        %v685 = vpop.f32.mrb[0].mxu0
        %v686 = vadd.f32 %v518, %v685
        %687 = vmatprep.mubr.f32.mxu0 0.0
        %688 = vmatmul.mubr.f32.gmra.mrb[0].mxu0 %v570
        %v689 = vpop.f32.mrb[0].mxu0
        %v690 = vadd.f32 %v523, %v689
        %v691 = vpop.f32.mrb[0].mxu0
        %v692 = vadd.f32 %v523, %v691
        %693 = vmatprep.mubr.f32.mxu0 0.0
        %694 = vmatmul.mubr.f32.gmra.mrb[0].mxu0 %v573
        %v695 = vpop.f32.mrb[0].mxu0
        %v696 = vadd.f32 %v528, %v695
        %v697 = vpop.f32.mrb[0].mxu0
        %v698 = vadd.f32 %v528, %v697
        %699 = vmatprep.mubr.f32.mxu0 0.0
        %700 = vmatmul.mubr.f32.gmra.mrb[0].mxu0 %v576
        %v701 = vpop.f32.mrb[0].mxu0
        %v702 = vadd.f32 %v533, %v701
        %v703 = vpop.f32.mrb[0].mxu0
        %v704 = vadd.f32 %v533, %v703
        %705 = vmatprep.mubr.f32.mxu0 0.0
        %706 = vmatmul.mubr.f32.gmra.mrb[0].mxu0 %v579
        %v707 = vpop.f32.mrb[0].mxu0
        %v708 = vadd.f32 %v538, %v707
        %v709 = vpop.f32.mrb[0].mxu0
        %v710 = vadd.f32 %v538, %v709
        %711 = vmatprep.mubr.f32.mxu0 0.0
        %712 = vmatmul.mubr.f32.gmra.mrb[0].mxu0 %v582
        %v713 = vpop.f32.mrb[0].mxu0
        %v714 = vadd.f32 %v543, %v713
        %v715 = vpop.f32.mrb[0].mxu0
        %v716 = vadd.f32 %v543, %v715
        %717 = vmatprep.mubr.f32.mxu0 0.0
        %718 = vmatmul.mubr.f32.gmra.mrb[0].mxu0 %v585
        %v719 = vpop.f32.mrb[0].mxu0
        %v720 = vadd.f32 %v548, %v719
        %v721 = vpop.f32.mrb[0].mxu0
        %v722 = vadd.f32 %v548, %v721
        %723 = vdwg.mxu0
        %724 = vmatprep.subr.mxu0 %v453
        %725 = vmatpush1.msra.mxu0 %v452
        %726 = vmatprep.subr.mxu0 %v457
        %727 = vmatpush1.msra.mxu0 %v456
        %728 = vmatprep.subr.mxu0 %v461
        %729 = vmatpush1.msra.mxu0 %v460
        %730 = vmatprep.subr.mxu0 %v465
        %731 = vmatpush1.msra.mxu0 %v464
        %732 = vmatprep.subr.mxu0 0.0
        %733 = vmatpush1.msra.mxu0 0.0
        %734 = vmatprep.subr.mxu0 0.0
        %735 = vmatpush1.msra.mxu0 0.0
        %736 = vmatprep.subr.mxu0 0.0
        %737 = vmatpush1.msra.mxu0 0.0
        %738 = vmatprep.subr.mxu0 0.0
        %739 = vmatpush1.msra.mxu0 0.0
        %740 = vmatprep.subr.mxu0 0.0
        %741 = vmatpush1.msra.mxu0 0.0
        %742 = vmatprep.subr.mxu0 0.0
        %743 = vmatpush1.msra.mxu0 0.0
        %744 = vmatprep.subr.mxu0 0.0
        %745 = vmatpush1.msra.mxu0 0.0
        %746 = vmatprep.subr.mxu0 0.0
        %747 = vmatpush1.msra.mxu0 0.0
        %748 = vmatprep.subr.mxu0 0.0
        %749 = vmatpush1.msra.mxu0 0.0
        %750 = vmatprep.subr.mxu0 0.0
        %751 = vmatpush1.msra.mxu0 0.0
        %752 = vmatprep.subr.mxu0 0.0
        %753 = vmatpush1.msra.mxu0 0.0
        %754 = vmatprep.subr.mxu0 0.0
        %755 = vmatpush1.msra.mxu0 0.0
        %756 = vmatprep.subr.mxu0 0.0
        %757 = vmatpush1.msra.mxu0 0.0
        %758 = vmatprep.subr.mxu0 0.0
        %759 = vmatpush1.msra.mxu0 0.0
        %760 = vmatprep.subr.mxu0 0.0
        %761 = vmatpush1.msra.mxu0 0.0
        %762 = vmatprep.subr.mxu0 0.0
        %763 = vmatpush1.msra.mxu0 0.0
        %764 = vmatprep.subr.mxu0 0.0
        %765 = vmatpush1.msra.mxu0 0.0
        %766 = vmatprep.subr.mxu0 0.0
        %767 = vmatpush1.msra.mxu0 0.0
        %768 = vmatprep.subr.mxu0 0.0
        %769 = vmatpush1.msra.mxu0 0.0
        %770 = vmatprep.subr.mxu0 0.0
        %771 = vmatpush1.msra.mxu0 0.0
        %772 = vmatprep.subr.mxu0 0.0
        %773 = vmatpush1.msra.mxu0 0.0
        %774 = vmatprep.subr.mxu0 0.0
        %775 = vmatpush1.msra.mxu0 0.0
        %776 = vmatprep.subr.mxu0 0.0
        %777 = vmatpush1.msra.mxu0 0.0
        %778 = vmatprep.subr.mxu0 0.0
        %779 = vmatpush1.msra.mxu0 0.0
        %780 = vmatprep.subr.mxu0 0.0
        %781 = vmatpush1.msra.mxu0 0.0
        %782 = vmatprep.subr.mxu0 0.0
        %783 = vmatpush1.msra.mxu0 0.0
        %784 = vmatprep.subr.mxu0 0.0
        %785 = vmatpush1.msra.mxu0 0.0
        %786 = vmatprep.subr.mxu0 0.0
        %787 = vmatpush1.msra.mxu0 0.0
        %788 = vmatprep.mubr.f32.mxu0 0.0
        %789 = vmatmul.mubr.f32.gmra.mrb[0].mxu0 %v552
        %v790 = vpop.f32.mrb[0].mxu0
        %v791 = vadd.f32 %v493, %v790
        %v792 = vpop.f32.mrb[0].mxu0
        %v793 = vadd.f32 %v493, %v792
        %794 = vmatprep.mubr.f32.mxu0 0.0
        %795 = vmatmul.mubr.f32.gmra.mrb[0].mxu0 %v555
        %v796 = vpop.f32.mrb[0].mxu0
        %v797 = vadd.f32 %v498, %v796
        %v798 = vpop.f32.mrb[0].mxu0
        %v799 = vadd.f32 %v498, %v798
        %800 = vmatprep.mubr.f32.mxu0 0.0
        %801 = vmatmul.mubr.f32.gmra.mrb[0].mxu0 %v558
        %v802 = vpop.f32.mrb[0].mxu0
        %v803 = vadd.f32 %v503, %v802
        %v804 = vpop.f32.mrb[0].mxu0
        %v805 = vadd.f32 %v503, %v804
        %806 = vmatprep.mubr.f32.mxu0 0.0
        %807 = vmatmul.mubr.f32.gmra.mrb[0].mxu0 %v561
        %v808 = vpop.f32.mrb[0].mxu0
        %v809 = vadd.f32 %v508, %v808
        %v810 = vpop.f32.mrb[0].mxu0
        %v811 = vadd.f32 %v508, %v810
        %812 = vmatprep.mubr.f32.mxu0 0.0
        %813 = vmatmul.mubr.f32.gmra.mrb[0].mxu0 %v564
        %v814 = vpop.f32.mrb[0].mxu0
        %v815 = vadd.f32 %v513, %v814
        %v816 = vpop.f32.mrb[0].mxu0
        %v817 = vadd.f32 %v513, %v816
        %818 = vmatprep.mubr.f32.mxu0 0.0
        %819 = vmatmul.mubr.f32.gmra.mrb[0].mxu0 %v567
        %v820 = vpop.f32.mrb[0].mxu0
        %v821 = vadd.f32 %v518, %v820
        %v822 = vpop.f32.mrb[0].mxu0
        %v823 = vadd.f32 %v518, %v822
        %824 = vmatprep.mubr.f32.mxu0 0.0
        %825 = vmatmul.mubr.f32.gmra.mrb[0].mxu0 %v570
        %v826 = vpop.f32.mrb[0].mxu0
        %v827 = vadd.f32 %v523, %v826
        %v828 = vpop.f32.mrb[0].mxu0
        %v829 = vadd.f32 %v523, %v828
        %830 = vmatprep.mubr.f32.mxu0 0.0
        %831 = vmatmul.mubr.f32.gmra.mrb[0].mxu0 %v573
        %v832 = vpop.f32.mrb[0].mxu0
        %v833 = vadd.f32 %v528, %v832
        %v834 = vpop.f32.mrb[0].mxu0
        %v835 = vadd.f32 %v528, %v834
        %836 = vmatprep.mubr.f32.mxu0 0.0
        %837 = vmatmul.mubr.f32.gmra.mrb[0].mxu0 %v576
        %v838 = vpop.f32.mrb[0].mxu0
        %v839 = vadd.f32 %v533, %v838
        %v840 = vpop.f32.mrb[0].mxu0
        %v841 = vadd.f32 %v533, %v840
        %842 = vmatprep.mubr.f32.mxu0 0.0
        %843 = vmatmul.mubr.f32.gmra.mrb[0].mxu0 %v579
        %v844 = vpop.f32.mrb[0].mxu0
        %v845 = vadd.f32 %v538, %v844
        %v846 = vpop.f32.mrb[0].mxu0
        %v847 = vadd.f32 %v538, %v846
        %848 = vmatprep.mubr.f32.mxu0 0.0
        %849 = vmatmul.mubr.f32.gmra.mrb[0].mxu0 %v582
        %v850 = vpop.f32.mrb[0].mxu0
        %v851 = vadd.f32 %v543, %v850
        %v852 = vpop.f32.mrb[0].mxu0
        %v853 = vadd.f32 %v543, %v852
        %854 = vmatprep.mubr.f32.mxu0 0.0
        %855 = vmatmul.mubr.f32.gmra.mrb[0].mxu0 %v585
        %v856 = vpop.f32.mrb[0].mxu0
        %v857 = vadd.f32 %v548, %v856
        %v858 = vpop.f32.mrb[0].mxu0
        %v859 = vadd.f32 %v548, %v858
        %860 = vdwg.mxu0
        %v861 = vmul.f32 %v654, 0.5
        %v862 = vmul.f32 %v656, 0.5
        %v863 = vmul.f32 %v791, 0.5
        %v864 = vmul.f32 %v793, 0.5
        %v865 = vmul.f32 %v660, 0.5
        %v866 = vmul.f32 %v662, 0.5
        %v867 = vmul.f32 %v797, 0.5
        %v868 = vmul.f32 %v799, 0.5
        %v869 = vmul.f32 %v666, 0.5
        %v870 = vmul.f32 %v668, 0.5
        %v871 = vmul.f32 %v803, 0.5
        %v872 = vmul.f32 %v805, 0.5
        %v873 = vmul.f32 %v672, 0.5
        %v874 = vmul.f32 %v674, 0.5
        %v875 = vmul.f32 %v809, 0.5
        %v876 = vmul.f32 %v811, 0.5
        %v877 = vtanh.pop %v861
        %v878 = vtanh.pop %v862
        %v879 = vtanh.pop %v863
        %v880 = vtanh.pop %v864
        %v881 = vtanh.pop %v865
        %v882 = vtanh.pop %v866
        %v883 = vtanh.pop %v867
        %v884 = vtanh.pop %v868
        %v885 = vtanh.pop %v869
        %v886 = vtanh.pop %v870
        %v887 = vtanh.pop %v871
        %v888 = vtanh.pop %v872
        %v889 = vtanh.pop %v873
        %v890 = vtanh.pop %v874
        %v891 = vtanh.pop %v875
        %v892 = vtanh.pop %v876
        %v893 = vadd.f32 %v877, 1.0
        %v894 = vadd.f32 %v878, 1.0
        %v895 = vadd.f32 %v879, 1.0
        %v896 = vadd.f32 %v880, 1.0
        %v897 = vadd.f32 %v881, 1.0
        %v898 = vadd.f32 %v882, 1.0
        %v899 = vadd.f32 %v883, 1.0
        %v900 = vadd.f32 %v884, 1.0
        %v901 = vadd.f32 %v885, 1.0
        %v902 = vadd.f32 %v886, 1.0
        %v903 = vadd.f32 %v887, 1.0
        %v904 = vadd.f32 %v888, 1.0
        %v905 = vadd.f32 %v889, 1.0
        %v906 = vadd.f32 %v890, 1.0
        %v907 = vadd.f32 %v891, 1.0
        %v908 = vadd.f32 %v892, 1.0
        %v909 = vmul.f32 %v893, 0.5
        %v910 = vmul.f32 %v894, 0.5
        %v911 = vmul.f32 %v895, 0.5
        %v912 = vmul.f32 %v896, 0.5
        %v913 = vmul.f32 %v897, 0.5
        %v914 = vmul.f32 %v898, 0.5
        %v915 = vmul.f32 %v899, 0.5
        %v916 = vmul.f32 %v900, 0.5
        %v917 = vmul.f32 %v901, 0.5
        %v918 = vmul.f32 %v902, 0.5
        %v919 = vmul.f32 %v903, 0.5
        %v920 = vmul.f32 %v904, 0.5
        %v921 = vmul.f32 %v905, 0.5
        %v922 = vmul.f32 %v906, 0.5
        %v923 = vmul.f32 %v907, 0.5
        %v924 = vmul.f32 %v908, 0.5
        %v925 = vtanh.pop %v678
        %v926 = vtanh.pop %v680
        %v927 = vtanh.pop %v815
        %v928 = vtanh.pop %v817
        %v929 = vtanh.pop %v684
        %v930 = vtanh.pop %v686
        %v931 = vtanh.pop %v821
        %v932 = vtanh.pop %v823
        %v933 = vtanh.pop %v690
        %v934 = vtanh.pop %v692
        %v935 = vtanh.pop %v827
        %v936 = vtanh.pop %v829
        %v937 = vtanh.pop %v696
        %v938 = vtanh.pop %v698
        %v939 = vtanh.pop %v833
        %v940 = vtanh.pop %v835
        %v941 = vmul.f32 %v702, 0.5
        %v942 = vmul.f32 %v704, 0.5
        %v943 = vmul.f32 %v839, 0.5
        %v944 = vmul.f32 %v841, 0.5
        %v945 = vmul.f32 %v708, 0.5
        %v946 = vmul.f32 %v710, 0.5
        %v947 = vmul.f32 %v845, 0.5
        %v948 = vmul.f32 %v847, 0.5
        %v949 = vmul.f32 %v714, 0.5
        %v950 = vmul.f32 %v716, 0.5
        %v951 = vmul.f32 %v851, 0.5
        %v952 = vmul.f32 %v853, 0.5
        %v953 = vmul.f32 %v720, 0.5
        %v954 = vmul.f32 %v722, 0.5
        %v955 = vmul.f32 %v857, 0.5
        %v956 = vmul.f32 %v859, 0.5
        %v957 = vtanh.pop %v941
        %v958 = vtanh.pop %v942
        %v959 = vtanh.pop %v943
        %v960 = vtanh.pop %v944
        %v961 = vtanh.pop %v945
        %v962 = vtanh.pop %v946
        %v963 = vtanh.pop %v947
        %v964 = vtanh.pop %v948
        %v965 = vtanh.pop %v949
        %v966 = vtanh.pop %v950
        %v967 = vtanh.pop %v951
        %v968 = vtanh.pop %v952
        %v969 = vtanh.pop %v953
        %v970 = vtanh.pop %v954
        %v971 = vtanh.pop %v955
        %v972 = vtanh.pop %v956
        %v973 = vadd.f32 %v957, 1.0
        %v974 = vadd.f32 %v958, 1.0
        %v975 = vadd.f32 %v959, 1.0
        %v976 = vadd.f32 %v960, 1.0
        %v977 = vadd.f32 %v961, 1.0
        %v978 = vadd.f32 %v962, 1.0
        %v979 = vadd.f32 %v963, 1.0
        %v980 = vadd.f32 %v964, 1.0
        %v981 = vadd.f32 %v965, 1.0
        %v982 = vadd.f32 %v966, 1.0
        %v983 = vadd.f32 %v967, 1.0
        %v984 = vadd.f32 %v968, 1.0
        %v985 = vadd.f32 %v969, 1.0
        %v986 = vadd.f32 %v970, 1.0
        %v987 = vadd.f32 %v971, 1.0
        %v988 = vadd.f32 %v972, 1.0
        %v989 = vmul.f32 %v973, 0.5
        %v990 = vmul.f32 %v974, 0.5
        %v991 = vmul.f32 %v975, 0.5
        %v992 = vmul.f32 %v976, 0.5
        %v993 = vmul.f32 %v977, 0.5
        %v994 = vmul.f32 %v978, 0.5
        %v995 = vmul.f32 %v979, 0.5
        %v996 = vmul.f32 %v980, 0.5
        %v997 = vmul.f32 %v981, 0.5
        %v998 = vmul.f32 %v982, 0.5
        %v999 = vmul.f32 %v983, 0.5
        %v1000 = vmul.f32 %v984, 0.5
        %v1001 = vmul.f32 %v985, 0.5
        %v1002 = vmul.f32 %v986, 0.5
        %v1003 = vmul.f32 %v987, 0.5
        %v1004 = vmul.f32 %v988, 0.5
        %v1005 = vmul.f32 %v909, %v925
        %v1006 = vmul.f32 %v910, %v926
        %v1007 = vmul.f32 %v911, %v927
        %v1008 = vmul.f32 %v912, %v928
        %v1009 = vmul.f32 %v913, %v929
        %v1010 = vmul.f32 %v914, %v930
        %v1011 = vmul.f32 %v915, %v931
        %v1012 = vmul.f32 %v916, %v932
        %v1013 = vmul.f32 %v917, %v933
        %v1014 = vmul.f32 %v918, %v934
        %v1015 = vmul.f32 %v919, %v935
        %v1016 = vmul.f32 %v920, %v936
        %v1017 = vmul.f32 %v921, %v937
        %v1018 = vmul.f32 %v922, %v938
        %v1019 = vmul.f32 %v923, %v939
        %v1020 = vmul.f32 %v924, %v940
        %v1021 = vtanh.pop %v1005
        %v1022 = vtanh.pop %v1006
        %v1023 = vtanh.pop %v1007
        %v1024 = vtanh.pop %v1008
        %v1025 = vtanh.pop %v1009
        %v1026 = vtanh.pop %v1010
        %v1027 = vtanh.pop %v1011
        %v1028 = vtanh.pop %v1012
        %v1029 = vtanh.pop %v1013
        %v1030 = vtanh.pop %v1014
        %v1031 = vtanh.pop %v1015
        %v1032 = vtanh.pop %v1016
        %v1033 = vtanh.pop %v1017
        %v1034 = vtanh.pop %v1018
        %v1035 = vtanh.pop %v1019
        %v1036 = vtanh.pop %v1020
        %v1037 = vmul.f32 %v989, %v1021
        %v1038 = vmul.f32 %v990, %v1022
        %v1039 = vmul.f32 %v991, %v1023
        %v1040 = vmul.f32 %v992, %v1024
        %v1041 = vmul.f32 %v993, %v1025
        %v1042 = vmul.f32 %v994, %v1026
        %v1043 = vmul.f32 %v995, %v1027
        %v1044 = vmul.f32 %v996, %v1028
        %v1045 = vmul.f32 %v997, %v1029
        %v1046 = vmul.f32 %v998, %v1030
        %v1047 = vmul.f32 %v999, %v1031
        %v1048 = vmul.f32 %v1000, %v1032
        %v1049 = vmul.f32 %v1001, %v1033
        %v1050 = vmul.f32 %v1002, %v1034
        %v1051 = vmul.f32 %v1003, %v1035
        %v1052 = vmul.f32 %v1004, %v1036
        %v1053 = vld [vmem:[#allocation5 + $0x90] sm:$0xff]
        %v1054 = vld [vmem:[#allocation5 + $0x98] sm:$0xff]
        %v1056 = vsel %vm550, %v1053, 0
        %v1059 = vsel %vm550, %v1054, 0
        %1061 = vmatprep.subr.mxu0 %v1038
        %1062 = vmatpush1.msra.mxu0 %v1037
        %1063 = vmatprep.subr.mxu0 %v1042
        %1064 = vmatpush1.msra.mxu0 %v1041
        %1065 = vmatprep.subr.mxu0 %v1046
        %1066 = vmatpush1.msra.mxu0 %v1045
        %1067 = vmatprep.subr.mxu0 %v1050
        %1068 = vmatpush1.msra.mxu0 %v1049
        %1069 = vmatprep.subr.mxu0 0.0
        %1070 = vmatpush1.msra.mxu0 0.0
        %1071 = vmatprep.subr.mxu0 0.0
        %1072 = vmatpush1.msra.mxu0 0.0
        %1073 = vmatprep.subr.mxu0 0.0
        %1074 = vmatpush1.msra.mxu0 0.0
        %1075 = vmatprep.subr.mxu0 0.0
        %1076 = vmatpush1.msra.mxu0 0.0
        %1077 = vmatprep.subr.mxu0 0.0
        %1078 = vmatpush1.msra.mxu0 0.0
        %1079 = vmatprep.subr.mxu0 0.0
        %1080 = vmatpush1.msra.mxu0 0.0
        %1081 = vmatprep.subr.mxu0 0.0
        %1082 = vmatpush1.msra.mxu0 0.0
        %1083 = vmatprep.subr.mxu0 0.0
        %1084 = vmatpush1.msra.mxu0 0.0
        %1085 = vmatprep.subr.mxu0 0.0
        %1086 = vmatpush1.msra.mxu0 0.0
        %1087 = vmatprep.subr.mxu0 0.0
        %1088 = vmatpush1.msra.mxu0 0.0
        %1089 = vmatprep.subr.mxu0 0.0
        %1090 = vmatpush1.msra.mxu0 0.0
        %1091 = vmatprep.subr.mxu0 0.0
        %1092 = vmatpush1.msra.mxu0 0.0
        %1093 = vmatprep.subr.mxu0 0.0
        %1094 = vmatpush1.msra.mxu0 0.0
        %1095 = vmatprep.subr.mxu0 0.0
        %1096 = vmatpush1.msra.mxu0 0.0
        %1097 = vmatprep.subr.mxu0 0.0
        %1098 = vmatpush1.msra.mxu0 0.0
        %1099 = vmatprep.subr.mxu0 0.0
        %1100 = vmatpush1.msra.mxu0 0.0
        %1101 = vmatprep.subr.mxu0 0.0
        %1102 = vmatpush1.msra.mxu0 0.0
        %1103 = vmatprep.subr.mxu0 0.0
        %1104 = vmatpush1.msra.mxu0 0.0
        %1105 = vmatprep.subr.mxu0 0.0
        %1106 = vmatpush1.msra.mxu0 0.0
        %1107 = vmatprep.subr.mxu0 0.0
        %1108 = vmatpush1.msra.mxu0 0.0
        %1109 = vmatprep.subr.mxu0 0.0
        %1110 = vmatpush1.msra.mxu0 0.0
        %1111 = vmatprep.subr.mxu0 0.0
        %1112 = vmatpush1.msra.mxu0 0.0
        %1113 = vmatprep.subr.mxu0 0.0
        %1114 = vmatpush1.msra.mxu0 0.0
        %1115 = vmatprep.subr.mxu0 0.0
        %1116 = vmatpush1.msra.mxu0 0.0
        %1117 = vmatprep.subr.mxu0 0.0
        %1118 = vmatpush1.msra.mxu0 0.0
        %1119 = vmatprep.subr.mxu0 0.0
        %1120 = vmatpush1.msra.mxu0 0.0
        %1121 = vmatprep.subr.mxu0 0.0
        %1122 = vmatpush1.msra.mxu0 0.0
        %1123 = vmatprep.subr.mxu0 0.0
        %1124 = vmatpush1.msra.mxu0 0.0
        %1125 = vmatprep.mubr.f32.mxu0 0.0
        %1126 = vmatmul.mubr.f32.gmra.mrb[0].mxu0 %v1056
        %v1127 = vpop.f32.mrb[0].mxu0
        %v1128 = vadd.f32 0.0, %v1127
        %v1129 = vpop.f32.mrb[0].mxu0
        %v1130 = vadd.f32 0.0, %v1129
        %1131 = vmatprep.mubr.f32.mxu0 0.0
        %1132 = vmatmul.mubr.f32.gmra.mrb[0].mxu0 %v1059
        %v1133 = vpop.f32.mrb[0].mxu0
        %v1134 = vadd.f32 0.0, %v1133
        %v1135 = vpop.f32.mrb[0].mxu0
        %v1136 = vadd.f32 0.0, %v1135
        %1137 = vdwg.mxu0
        %1138 = vmatprep.subr.mxu0 %v1040
        %1139 = vmatpush1.msra.mxu0 %v1039
        %1140 = vmatprep.subr.mxu0 %v1044
        %1141 = vmatpush1.msra.mxu0 %v1043
        %1142 = vmatprep.subr.mxu0 %v1048
        %1143 = vmatpush1.msra.mxu0 %v1047
        %1144 = vmatprep.subr.mxu0 %v1052
        %1145 = vmatpush1.msra.mxu0 %v1051
        %1146 = vmatprep.subr.mxu0 0.0
        %1147 = vmatpush1.msra.mxu0 0.0
        %1148 = vmatprep.subr.mxu0 0.0
        %1149 = vmatpush1.msra.mxu0 0.0
        %1150 = vmatprep.subr.mxu0 0.0
        %1151 = vmatpush1.msra.mxu0 0.0
        %1152 = vmatprep.subr.mxu0 0.0
        %1153 = vmatpush1.msra.mxu0 0.0
        %1154 = vmatprep.subr.mxu0 0.0
        %1155 = vmatpush1.msra.mxu0 0.0
        %1156 = vmatprep.subr.mxu0 0.0
        %1157 = vmatpush1.msra.mxu0 0.0
        %1158 = vmatprep.subr.mxu0 0.0
        %1159 = vmatpush1.msra.mxu0 0.0
        %1160 = vmatprep.subr.mxu0 0.0
        %1161 = vmatpush1.msra.mxu0 0.0
        %1162 = vmatprep.subr.mxu0 0.0
        %1163 = vmatpush1.msra.mxu0 0.0
        %1164 = vmatprep.subr.mxu0 0.0
        %1165 = vmatpush1.msra.mxu0 0.0
        %1166 = vmatprep.subr.mxu0 0.0
        %1167 = vmatpush1.msra.mxu0 0.0
        %1168 = vmatprep.subr.mxu0 0.0
        %1169 = vmatpush1.msra.mxu0 0.0
        %1170 = vmatprep.subr.mxu0 0.0
        %1171 = vmatpush1.msra.mxu0 0.0
        %1172 = vmatprep.subr.mxu0 0.0
        %1173 = vmatpush1.msra.mxu0 0.0
        %1174 = vmatprep.subr.mxu0 0.0
        %1175 = vmatpush1.msra.mxu0 0.0
        %1176 = vmatprep.subr.mxu0 0.0
        %1177 = vmatpush1.msra.mxu0 0.0
        %1178 = vmatprep.subr.mxu0 0.0
        %1179 = vmatpush1.msra.mxu0 0.0
        %1180 = vmatprep.subr.mxu0 0.0
        %1181 = vmatpush1.msra.mxu0 0.0
        %1182 = vmatprep.subr.mxu0 0.0
        %1183 = vmatpush1.msra.mxu0 0.0
        %1184 = vmatprep.subr.mxu0 0.0
        %1185 = vmatpush1.msra.mxu0 0.0
        %1186 = vmatprep.subr.mxu0 0.0
        %1187 = vmatpush1.msra.mxu0 0.0
        %1188 = vmatprep.subr.mxu0 0.0
        %1189 = vmatpush1.msra.mxu0 0.0
        %1190 = vmatprep.subr.mxu0 0.0
        %1191 = vmatpush1.msra.mxu0 0.0
        %1192 = vmatprep.subr.mxu0 0.0
        %1193 = vmatpush1.msra.mxu0 0.0
        %1194 = vmatprep.subr.mxu0 0.0
        %1195 = vmatpush1.msra.mxu0 0.0
        %1196 = vmatprep.subr.mxu0 0.0
        %1197 = vmatpush1.msra.mxu0 0.0
        %1198 = vmatprep.subr.mxu0 0.0
        %1199 = vmatpush1.msra.mxu0 0.0
        %1200 = vmatprep.subr.mxu0 0.0
        %1201 = vmatpush1.msra.mxu0 0.0
        %1202 = vmatprep.mubr.f32.mxu0 0.0
        %1203 = vmatmul.mubr.f32.gmra.mrb[0].mxu0 %v1056
        %v1204 = vpop.f32.mrb[0].mxu0
        %v1205 = vadd.f32 0.0, %v1204
        %v1206 = vpop.f32.mrb[0].mxu0
        %v1207 = vadd.f32 0.0, %v1206
        %1208 = vmatprep.mubr.f32.mxu0 0.0
        %1209 = vmatmul.mubr.f32.gmra.mrb[0].mxu0 %v1059
        %v1210 = vpop.f32.mrb[0].mxu0
        %v1211 = vadd.f32 0.0, %v1210
        %v1212 = vpop.f32.mrb[0].mxu0
        %v1213 = vadd.f32 0.0, %v1212
        %1214 = vdwg.mxu0
        %v1215 = vadd.f32 %v339, %v1128
        %v1216 = vadd.f32 %v341, %v1130
        %v1217 = vadd.f32 %v440, %v1205
        %v1218 = vadd.f32 %v442, %v1207
        %v1219 = vadd.f32 %v345, %v1134
        %v1220 = vadd.f32 %v347, %v1136
        %v1221 = vadd.f32 %v446, %v1211
        %v1222 = vadd.f32 %v448, %v1213
        %v1223 = vmax.f32 %v1215, 0.0
        %v1224 = vmax.f32 %v1216, 0.0
        %v1225 = vmax.f32 %v1217, 0.0
        %v1226 = vmax.f32 %v1218, 0.0
        %v1227 = vmax.f32 %v1219, 0.0
        %v1228 = vmax.f32 %v1220, 0.0
        %v1229 = vmax.f32 %v1221, 0.0
        %v1230 = vmax.f32 %v1222, 0.0
        %v1231 = vld [vmem:[#allocation5 + $0xa0] sm:$0xff]
        %v1232 = vld [vmem:[#allocation5 + $0x138] sm:$0xff]
        %1234 = vset.pattern.permute.xlu0 0
        %1235 = vperm.xlu0 %1234, %v1232
        %v1236 = vpop.permute.xlu0 %1235
        %v1239 = vsel %vm229, %v1231, 0
        %1241 = vmatprep.subr.mxu0 %v1224
        %1242 = vmatpush1.msra.mxu0 %v1223
        %1243 = vmatprep.subr.mxu0 %v1228
        %1244 = vmatpush1.msra.mxu0 %v1227
        %1245 = vmatprep.subr.mxu0 0.0
        %1246 = vmatpush1.msra.mxu0 0.0
        %1247 = vmatprep.subr.mxu0 0.0
        %1248 = vmatpush1.msra.mxu0 0.0
        %1249 = vmatprep.subr.mxu0 0.0
        %1250 = vmatpush1.msra.mxu0 0.0
        %1251 = vmatprep.subr.mxu0 0.0
        %1252 = vmatpush1.msra.mxu0 0.0
        %1253 = vmatprep.subr.mxu0 0.0
        %1254 = vmatpush1.msra.mxu0 0.0
        %1255 = vmatprep.subr.mxu0 0.0
        %1256 = vmatpush1.msra.mxu0 0.0
        %1257 = vmatprep.subr.mxu0 0.0
        %1258 = vmatpush1.msra.mxu0 0.0
        %1259 = vmatprep.subr.mxu0 0.0
        %1260 = vmatpush1.msra.mxu0 0.0
        %1261 = vmatprep.subr.mxu0 0.0
        %1262 = vmatpush1.msra.mxu0 0.0
        %1263 = vmatprep.subr.mxu0 0.0
        %1264 = vmatpush1.msra.mxu0 0.0
        %1265 = vmatprep.subr.mxu0 0.0
        %1266 = vmatpush1.msra.mxu0 0.0
        %1267 = vmatprep.subr.mxu0 0.0
        %1268 = vmatpush1.msra.mxu0 0.0
        %1269 = vmatprep.subr.mxu0 0.0
        %1270 = vmatpush1.msra.mxu0 0.0
        %1271 = vmatprep.subr.mxu0 0.0
        %1272 = vmatpush1.msra.mxu0 0.0
        %1273 = vmatprep.subr.mxu0 0.0
        %1274 = vmatpush1.msra.mxu0 0.0
        %1275 = vmatprep.subr.mxu0 0.0
        %1276 = vmatpush1.msra.mxu0 0.0
        %1277 = vmatprep.subr.mxu0 0.0
        %1278 = vmatpush1.msra.mxu0 0.0
        %1279 = vmatprep.subr.mxu0 0.0
        %1280 = vmatpush1.msra.mxu0 0.0
        %1281 = vmatprep.subr.mxu0 0.0
        %1282 = vmatpush1.msra.mxu0 0.0
        %1283 = vmatprep.subr.mxu0 0.0
        %1284 = vmatpush1.msra.mxu0 0.0
        %1285 = vmatprep.subr.mxu0 0.0
        %1286 = vmatpush1.msra.mxu0 0.0
        %1287 = vmatprep.subr.mxu0 0.0
        %1288 = vmatpush1.msra.mxu0 0.0
        %1289 = vmatprep.subr.mxu0 0.0
        %1290 = vmatpush1.msra.mxu0 0.0
        %1291 = vmatprep.subr.mxu0 0.0
        %1292 = vmatpush1.msra.mxu0 0.0
        %1293 = vmatprep.subr.mxu0 0.0
        %1294 = vmatpush1.msra.mxu0 0.0
        %1295 = vmatprep.subr.mxu0 0.0
        %1296 = vmatpush1.msra.mxu0 0.0
        %1297 = vmatprep.subr.mxu0 0.0
        %1298 = vmatpush1.msra.mxu0 0.0
        %1299 = vmatprep.subr.mxu0 0.0
        %1300 = vmatpush1.msra.mxu0 0.0
        %1301 = vmatprep.subr.mxu0 0.0
        %1302 = vmatpush1.msra.mxu0 0.0
        %1303 = vmatprep.subr.mxu0 0.0
        %1304 = vmatpush1.msra.mxu0 0.0
        %1305 = vmatprep.mubr.f32.mxu0 0.0
        %1306 = vmatmul.mubr.f32.gmra.mrb[0].mxu0 %v1239
        %v1307 = vpop.f32.mrb[0].mxu0
        %v1308 = vadd.f32 %v1236, %v1307
        %v1309 = vpop.f32.mrb[0].mxu0
        %v1310 = vadd.f32 %v1236, %v1309
        %1311 = vdwg.mxu0
        %1312 = vmatprep.subr.mxu0 %v1226
        %1313 = vmatpush1.msra.mxu0 %v1225
        %1314 = vmatprep.subr.mxu0 %v1230
        %1315 = vmatpush1.msra.mxu0 %v1229
        %1316 = vmatprep.subr.mxu0 0.0
        %1317 = vmatpush1.msra.mxu0 0.0
        %1318 = vmatprep.subr.mxu0 0.0
        %1319 = vmatpush1.msra.mxu0 0.0
        %1320 = vmatprep.subr.mxu0 0.0
        %1321 = vmatpush1.msra.mxu0 0.0
        %1322 = vmatprep.subr.mxu0 0.0
        %1323 = vmatpush1.msra.mxu0 0.0
        %1324 = vmatprep.subr.mxu0 0.0
        %1325 = vmatpush1.msra.mxu0 0.0
        %1326 = vmatprep.subr.mxu0 0.0
        %1327 = vmatpush1.msra.mxu0 0.0
        %1328 = vmatprep.subr.mxu0 0.0
        %1329 = vmatpush1.msra.mxu0 0.0
        %1330 = vmatprep.subr.mxu0 0.0
        %1331 = vmatpush1.msra.mxu0 0.0
        %1332 = vmatprep.subr.mxu0 0.0
        %1333 = vmatpush1.msra.mxu0 0.0
        %1334 = vmatprep.subr.mxu0 0.0
        %1335 = vmatpush1.msra.mxu0 0.0
        %1336 = vmatprep.subr.mxu0 0.0
        %1337 = vmatpush1.msra.mxu0 0.0
        %1338 = vmatprep.subr.mxu0 0.0
        %1339 = vmatpush1.msra.mxu0 0.0
        %1340 = vmatprep.subr.mxu0 0.0
        %1341 = vmatpush1.msra.mxu0 0.0
        %1342 = vmatprep.subr.mxu0 0.0
        %1343 = vmatpush1.msra.mxu0 0.0
        %1344 = vmatprep.subr.mxu0 0.0
        %1345 = vmatpush1.msra.mxu0 0.0
        %1346 = vmatprep.subr.mxu0 0.0
        %1347 = vmatpush1.msra.mxu0 0.0
        %1348 = vmatprep.subr.mxu0 0.0
        %1349 = vmatpush1.msra.mxu0 0.0
        %1350 = vmatprep.subr.mxu0 0.0
        %1351 = vmatpush1.msra.mxu0 0.0
        %1352 = vmatprep.subr.mxu0 0.0
        %1353 = vmatpush1.msra.mxu0 0.0
        %1354 = vmatprep.subr.mxu0 0.0
        %1355 = vmatpush1.msra.mxu0 0.0
        %1356 = vmatprep.subr.mxu0 0.0
        %1357 = vmatpush1.msra.mxu0 0.0
        %1358 = vmatprep.subr.mxu0 0.0
        %1359 = vmatpush1.msra.mxu0 0.0
        %1360 = vmatprep.subr.mxu0 0.0
        %1361 = vmatpush1.msra.mxu0 0.0
        %1362 = vmatprep.subr.mxu0 0.0
        %1363 = vmatpush1.msra.mxu0 0.0
        %1364 = vmatprep.subr.mxu0 0.0
        %1365 = vmatpush1.msra.mxu0 0.0
        %1366 = vmatprep.subr.mxu0 0.0
        %1367 = vmatpush1.msra.mxu0 0.0
        %1368 = vmatprep.subr.mxu0 0.0
        %1369 = vmatpush1.msra.mxu0 0.0
        %1370 = vmatprep.subr.mxu0 0.0
        %1371 = vmatpush1.msra.mxu0 0.0
        %1372 = vmatprep.subr.mxu0 0.0
        %1373 = vmatpush1.msra.mxu0 0.0
        %1374 = vmatprep.subr.mxu0 0.0
        %1375 = vmatpush1.msra.mxu0 0.0
        %1376 = vmatprep.mubr.f32.mxu0 0.0
        %1377 = vmatmul.mubr.f32.gmra.mrb[0].mxu0 %v1239
        %v1378 = vpop.f32.mrb[0].mxu0
        %v1379 = vadd.f32 %v1236, %v1378
        %v1380 = vpop.f32.mrb[0].mxu0
        %v1381 = vadd.f32 %v1236, %v1380
        %1382 = vdwg.mxu0
        %1383 = vst [vmem:[%s176] sm:$0xff] %v1308
        %1384 = vst [vmem:[%s176 + $0x8] sm:$0xff] %v1310
        %1385 = vst [vmem:[%s176 + $0x10] sm:$0xff] %v1379
        %1386 = vst [vmem:[%s176 + $0x18] sm:$0xff] %v1381
        %s1387 = sand.u32 %s75, 1
        %s1388 = scalar_lea.sflag [#allocation4], %s1387
        %s1389 = sand.u32 %s75, 1
        %s1390 = smul.addr %s1389, 32
        %s1391 = scalar_lea.vmem [#allocation7], %s1390
        // Predicated region
        $region37: #{tpu_custom_call.1} parent=27 // pred_check
          %p1392 = pneg %p85
        $region38: #{tpu_custom_call.1} parent=27 // pred_check_branch
          %1394 = sbr.rel (%p1392) target = $region40
        $region39: #{tpu_custom_call.1} parent=27 // pred_region
          %s1395 = smul.u32 4, %s20
          %s1397 = ssub.s32 512, 512
          %1398 = vsyncadd %s1388, %s1397
          %s1399 = smul.addr %s1395, 128
          %s1400 = scalar_lea.hbm %s2, %s1399
          %s1402 = sshll.u32 %s1391, 4
          %s1403 = int_to_ptr.vmem [resolvable:$true] %s1402
          %1405 = dma.vmem_to_hbm [thread:$0]  %s1403, 512, %s1400, %s1388
        $region40: #{tpu_custom_call.1} parent=27 // pred_fallthru
          _
      $region28: #{tpu_custom_call.1} parent=5 // pred_fallthru
        _
      %p1406 = scmp.le.s32.totalorder 2, %s15
      // Predicated region
      $region41: #{tpu_custom_call.1} parent=5 // pred_check
        %p1407 = pneg %p1406
      $region42: #{tpu_custom_call.1} parent=5 // pred_check_branch
        %1409 = sbr.rel (%p1407) target = $region44
      $region43: #{tpu_custom_call.1} parent=5 // pred_region
        %s1410 = ssub.s32 %s15, 2
        // Predicated region
        $region45: #{tpu_custom_call.1} parent=43 // pred_check
          %p1411 = pneg %p91
        $region46: #{tpu_custom_call.1} parent=43 // pred_check_branch
          %1413 = sbr.rel (%p1411) target = $region48
        $region47: #{tpu_custom_call.1} parent=43 // pred_region
          %s1414 = sand.u32 %s76, 1
          %s1415 = scalar_lea.sflag [#allocation4], %s1414
          %s1416 = sand.u32 %s76, 1
          %s1417 = smul.addr %s1416, 32
          %s1418 = scalar_lea.vmem [#allocation7], %s1417
          %1419 = dma.done %s1415, 512
        $region48: #{tpu_custom_call.1} parent=43 // pred_fallthru
          _
      $region44: #{tpu_custom_call.1} parent=5 // pred_fallthru
        _
    $region6: #{tpu_custom_call.1} parent=1 // loop_footer
      %s19 = sadd.s32 1, %s15
    $region7: #{tpu_custom_call.1} parent=1 // loop_footer_branch
      %14 = sbr.rel target = $region3
    $region8: #{tpu_custom_call.1} parent=1 // loop_exit
      _
    %1420 = vsyncpa [#allocation3], 1
    %s1421 = scalar_lea.sflag [#allocation3], 1
    %1422 = vsyncpa %s1421, 1
    %1423 = vsyncpa [#allocation6], 1
    %1424 = vsyncpa [#allocation4], 1
    %s1425 = scalar_lea.sflag [#allocation4], 1
    %1426 = vsyncpa %s1425, 1

</llo_original>
